<compile_context>
chip_gen: v5e
topology: v5e:2x2
jax: 0.10.0
libtpu: 0.0.40
codegen_flags: <defaults>
</compile_context>

<pallas_src>
import jax
import jax.numpy as jnp
from jax.experimental import pallas as pl
from jax.experimental.pallas import tpu as pltpu

HIDDEN = 64     # hidden_size (PyTorch default arg)
FC1_DIM = 32    # fc1 output width
SUBLANE = 8     # f32 sublane tile


def lstm_dqn_kernel(x_ref,                       # (T*Bp, I) time-major flattened
                    wih0_ref, whh0_ref, b0_ref,  # layer-0 LSTM params
                    wih1_ref, whh1_ref, b1_ref,  # layer-1 LSTM params
                    wfc1_ref, bfc1_ref, wfc2_ref, bfc2_ref,
                    out_ref,                     # (Bp, O)
                    h1seq_ref):                  # VMEM scratch (T*Bp, H)
    TB = x_ref.shape[0]
    H = whh0_ref.shape[0]
    B = out_ref.shape[0]          # padded batch (multiple of 8)
    T = TB // B

    whh0 = whh0_ref[...]
    whh1 = whh1_ref[...]

    def lstm_step(zx, h, c, whh):
        # zx: (B, 4H) precomputed input projection, bias already folded in.
        gates = zx + jnp.dot(h, whh, preferred_element_type=jnp.float32)
        # Full-width transcendentals; slice afterwards for the combine.
        # PyTorch gate order: i, f, g, o.
        sig = jax.nn.sigmoid(gates)
        th = jnp.tanh(gates)
        i = sig[:, 0 * H:1 * H]
        f = sig[:, 1 * H:2 * H]
        g = th[:, 2 * H:3 * H]
        o = sig[:, 3 * H:4 * H]
        c_new = f * c + i * g
        h_new = o * jnp.tanh(c_new)
        return h_new, c_new

    # ---- layer 0: hoisted input projection (one GEMM over all timesteps) ----
    xp0 = (jnp.dot(x_ref[...], wih0_ref[...], preferred_element_type=jnp.float32)
           + b0_ref[...])                                     # (T*B, 4H)

    # ---- layer-0 recurrence, fully unrolled (T static, offsets 8-aligned) ----
    h1 = jnp.zeros((B, H), jnp.float32)
    c1 = jnp.zeros((B, H), jnp.float32)
    for t in range(T):
        h1, c1 = lstm_step(xp0[t * B:(t + 1) * B, :], h1, c1, whh0)
        h1seq_ref[t * B:(t + 1) * B, :] = h1

    # ---- layer 1: hoisted input projection over the whole h1 sequence ----
    xp1 = (jnp.dot(h1seq_ref[...], wih1_ref[...],
                   preferred_element_type=jnp.float32)
           + b1_ref[...])                                     # (T*B, 4H)

    # ---- layer-1 recurrence, fully unrolled ----
    h2 = jnp.zeros((B, H), jnp.float32)
    c2 = jnp.zeros((B, H), jnp.float32)
    for t in range(T):
        h2, c2 = lstm_step(xp1[t * B:(t + 1) * B, :], h2, c2, whh1)

    # ---- fc1 + ReLU + fc2 on the last hidden state ----
    z = jnp.maximum(
        jnp.dot(h2, wfc1_ref[...], preferred_element_type=jnp.float32)
        + bfc1_ref[...], 0.0)
    out_ref[...] = (jnp.dot(z, wfc2_ref[...], preferred_element_type=jnp.float32)
                    + bfc2_ref[...]).astype(out_ref.dtype)


def lstm_dqn_forward(x, params):
    """Pallas forward pass. x: (B, T, input_size) or (B, input_size)."""
    if x.ndim == 2:          # mirror the PyTorch unsqueeze(1)
        x = x[:, None, :]
    B, T, I = x.shape
    H = params["w_hh0"].shape[0]
    out_dim = params["w_fc2"].shape[1]

    # Pad batch to a sublane multiple so every in-kernel row slice is aligned.
    Bp = ((B + SUBLANE - 1) // SUBLANE) * SUBLANE
    if Bp != B:
        x = jnp.concatenate(
            [x, jnp.zeros((Bp - B, T, I), x.dtype)], axis=0)

    # Time-major flatten: row t*Bp + b holds (batch b, time t).
    x_tm = jnp.transpose(x, (1, 0, 2)).reshape(T * Bp, I).astype(jnp.float32)

    inputs = (x_tm,
              params["w_ih0"], params["w_hh0"], params["b0"],
              params["w_ih1"], params["w_hh1"], params["b1"],
              params["w_fc1"], params["b_fc1"],
              params["w_fc2"], params["b_fc2"])

    vmem = pl.BlockSpec(memory_space=pltpu.MemorySpace.VMEM)
    out = pl.pallas_call(
        lstm_dqn_kernel,
        out_shape=jax.ShapeDtypeStruct((Bp, out_dim), jnp.float32),
        in_specs=[vmem] * len(inputs),
        out_specs=vmem,
        scratch_shapes=[pltpu.VMEM((T * Bp, H), jnp.float32)],
    )(*inputs)
    return out[:B]


def init_params(key, input_size, output_size, hidden_size=HIDDEN):
    """Deterministic PyTorch-style uniform init, with weights pre-transposed."""
    ks = jax.random.split(key, 12)
    k_lstm = 1.0 / jnp.sqrt(hidden_size)
    k_fc1 = 1.0 / jnp.sqrt(hidden_size)
    k_fc2 = 1.0 / jnp.sqrt(FC1_DIM)

    def u(k, shape, bound):
        return jax.random.uniform(k, shape, jnp.float32, -bound, bound)

    params = {
        # layer 0: W_ih (4H, I) -> stored transposed (I, 4H); W_hh (4H, H) -> (H, 4H)
        "w_ih0": u(ks[0], (input_size, 4 * hidden_size), k_lstm),
        "w_hh0": u(ks[1], (hidden_size, 4 * hidden_size), k_lstm),
        # b_ih + b_hh folded into one row vector
        "b0": (u(ks[2], (1, 4 * hidden_size), k_lstm)
               + u(ks[3], (1, 4 * hidden_size), k_lstm)),
        # layer 1
        "w_ih1": u(ks[4], (hidden_size, 4 * hidden_size), k_lstm),
        "w_hh1": u(ks[5], (hidden_size, 4 * hidden_size), k_lstm),
        "b1": (u(ks[6], (1, 4 * hidden_size), k_lstm)
               + u(ks[7], (1, 4 * hidden_size), k_lstm)),
        # fc1: (32, H) -> (H, 32)
        "w_fc1": u(ks[8], (hidden_size, FC1_DIM), k_fc1),
        "b_fc1": u(ks[9], (1, FC1_DIM), k_fc1),
        # fc2: (O, 32) -> (32, O)
        "w_fc2": u(ks[10], (FC1_DIM, output_size), k_fc2),
        "b_fc2": u(ks[11], (1, output_size), k_fc2),
    }
    return params


def lstm_dqn_reference(x, params):
    """Pure-JAX reference for validation (same math as the PyTorch module)."""
    if x.ndim == 2:
        x = x[:, None, :]
    B, T, _ = x.shape
    H = HIDDEN

    def cell(x_t, h, c, wih, whh, b):
        gates = x_t @ wih + h @ whh + b
        i = jax.nn.sigmoid(gates[:, 0 * H:1 * H])
        f = jax.nn.sigmoid(gates[:, 1 * H:2 * H])
        g = jnp.tanh(gates[:, 2 * H:3 * H])
        o = jax.nn.sigmoid(gates[:, 3 * H:4 * H])
        c_new = f * c + i * g
        return o * jnp.tanh(c_new), c_new

    h1 = c1 = h2 = c2 = jnp.zeros((B, H), jnp.float32)
    for t in range(T):
        h1, c1 = cell(x[:, t, :], h1, c1, params["w_ih0"], params["w_hh0"], params["b0"])
        h2, c2 = cell(h1, h2, c2, params["w_ih1"], params["w_hh1"], params["b1"])
    z = jnp.maximum(h2 @ params["w_fc1"] + params["b_fc1"], 0.0)
    return z @ params["w_fc2"] + params["b_fc2"]


if __name__ == "__main__":
    B, T, INPUT_SIZE, OUTPUT_SIZE = 2, 8, 16, 4

    key = jax.random.PRNGKey(0)
    k_x, k_p = jax.random.split(key)
    x = jax.random.normal(k_x, (B, T, INPUT_SIZE), jnp.float32)
    params = init_params(k_p, INPUT_SIZE, OUTPUT_SIZE)

    out = lstm_dqn_forward(x, params)
    out = jax.block_until_ready(out)

    ref = lstm_dqn_reference(x, params)
    assert out.shape == (B, OUTPUT_SIZE)
    assert jnp.allclose(out, ref, atol=1e-5, rtol=1e-5), "mismatch vs JAX reference"

    print("KERNEL_OK")
</pallas_src>

<mosaic_0001>
module attributes {stable_mosaic.version = 11 : i64} {
  func.func @lstm_dqn_kernel(%arg0: memref<64x16xf32, #tpu.memory_space<vmem>>, %arg1: memref<16x256xf32, #tpu.memory_space<vmem>>, %arg2: memref<64x256xf32, #tpu.memory_space<vmem>>, %arg3: memref<1x256xf32, #tpu.memory_space<vmem>>, %arg4: memref<64x256xf32, #tpu.memory_space<vmem>>, %arg5: memref<64x256xf32, #tpu.memory_space<vmem>>, %arg6: memref<1x256xf32, #tpu.memory_space<vmem>>, %arg7: memref<64x32xf32, #tpu.memory_space<vmem>>, %arg8: memref<1x32xf32, #tpu.memory_space<vmem>>, %arg9: memref<32x4xf32, #tpu.memory_space<vmem>>, %arg10: memref<1x4xf32, #tpu.memory_space<vmem>>, %arg11: memref<8x4xf32, #tpu.memory_space<vmem>>, %arg12: memref<64x64xf32, #tpu.memory_space<vmem>>) attributes {dimension_semantics = [], scalar_prefetch = 0 : i64, scratch_operands = 1 : i64, tpu.core_type = #tpu.core_type<tc>} {
    %c0 = arith.constant 0 : index
    %c0_0 = arith.constant 0 : index
    %0 = vector.load %arg2[%c0, %c0_0] : memref<64x256xf32, #tpu.memory_space<vmem>>, vector<64x256xf32>
    %c0_1 = arith.constant 0 : index
    %c0_2 = arith.constant 0 : index
    %1 = vector.load %arg5[%c0_1, %c0_2] : memref<64x256xf32, #tpu.memory_space<vmem>>, vector<64x256xf32>
    %c0_3 = arith.constant 0 : index
    %c0_4 = arith.constant 0 : index
    %2 = vector.load %arg0[%c0_3, %c0_4] : memref<64x16xf32, #tpu.memory_space<vmem>>, vector<64x16xf32>
    %c0_5 = arith.constant 0 : index
    %c0_6 = arith.constant 0 : index
    %3 = vector.load %arg1[%c0_5, %c0_6] : memref<16x256xf32, #tpu.memory_space<vmem>>, vector<16x256xf32>
    %cst = arith.constant dense<0.000000e+00> : vector<64x256xf32>
    %4 = tpu.matmul %2, %3, %cst {dimension_numbers = #tpu.dot_dimension_numbers<[1], [0], [0], [1], [0, 0, 1, 1], [], []>} : vector<64x16xf32>, vector<16x256xf32>, vector<64x256xf32> -> vector<64x256xf32>
    %c0_7 = arith.constant 0 : index
    %c0_8 = arith.constant 0 : index
    %5 = vector.load %arg3[%c0_7, %c0_8] : memref<1x256xf32, #tpu.memory_space<vmem>>, vector<1x256xf32>
    %6 = vector.broadcast %5 : vector<1x256xf32> to vector<64x256xf32>
    %7 = arith.addf %4, %6 : vector<64x256xf32>
    %cst_9 = arith.constant 0.000000e+00 : f32
    %8 = vector.broadcast %cst_9 : f32 to vector<8x64xf32>
    %cst_10 = arith.constant 0.000000e+00 : f32
    %9 = vector.broadcast %cst_10 : f32 to vector<8x64xf32>
    %10 = vector.extract_strided_slice %7 {offsets = [0, 0], sizes = [8, 256], strides = [1, 1]} : vector<64x256xf32> to vector<8x256xf32>
    %cst_11 = arith.constant dense<0.000000e+00> : vector<8x256xf32>
    %11 = tpu.matmul %8, %0, %cst_11 {dimension_numbers = #tpu.dot_dimension_numbers<[1], [0], [0], [1], [0, 0, 1, 1], [], []>} : vector<8x64xf32>, vector<64x256xf32>, vector<8x256xf32> -> vector<8x256xf32>
    %12 = arith.addf %10, %11 : vector<8x256xf32>
    %13 = arith.negf %12 : vector<8x256xf32>
    %14 = math.exp %13 : vector<8x256xf32>
    %cst_12 = arith.constant 1.000000e+00 : f32
    %15 = vector.broadcast %cst_12 : f32 to vector<8x256xf32>
    %16 = arith.addf %15, %14 : vector<8x256xf32>
    %17 = arith.divf %15, %16 : vector<8x256xf32>
    %18 = math.tanh %12 : vector<8x256xf32>
    %19 = vector.extract_strided_slice %17 {offsets = [0, 0], sizes = [8, 64], strides = [1, 1]} : vector<8x256xf32> to vector<8x64xf32>
    %20 = vector.extract_strided_slice %17 {offsets = [0, 64], sizes = [8, 64], strides = [1, 1]} : vector<8x256xf32> to vector<8x64xf32>
    %21 = vector.extract_strided_slice %18 {offsets = [0, 128], sizes = [8, 64], strides = [1, 1]} : vector<8x256xf32> to vector<8x64xf32>
    %22 = vector.extract_strided_slice %17 {offsets = [0, 192], sizes = [8, 64], strides = [1, 1]} : vector<8x256xf32> to vector<8x64xf32>
    %23 = arith.mulf %20, %9 : vector<8x64xf32>
    %24 = arith.mulf %19, %21 : vector<8x64xf32>
    %25 = arith.addf %23, %24 : vector<8x64xf32>
    %26 = math.tanh %25 : vector<8x64xf32>
    %27 = arith.mulf %22, %26 : vector<8x64xf32>
    %c0_13 = arith.constant 0 : index
    %c0_14 = arith.constant 0 : index
    %28 = vector.load %arg12[%c0_13, %c0_14] : memref<64x64xf32, #tpu.memory_space<vmem>>, vector<8x64xf32>
    tpu.vector_store %arg12[%c0_13, %c0_14], %27 {strides = array<i32>} : memref<64x64xf32, #tpu.memory_space<vmem>>, vector<8x64xf32>,
    %29 = vector.extract_strided_slice %7 {offsets = [8, 0], sizes = [8, 256], strides = [1, 1]} : vector<64x256xf32> to vector<8x256xf32>
    %cst_15 = arith.constant dense<0.000000e+00> : vector<8x256xf32>
    %30 = tpu.matmul %27, %0, %cst_15 {dimension_numbers = #tpu.dot_dimension_numbers<[1], [0], [0], [1], [0, 0, 1, 1], [], []>} : vector<8x64xf32>, vector<64x256xf32>, vector<8x256xf32> -> vector<8x256xf32>
    %31 = arith.addf %29, %30 : vector<8x256xf32>
    %32 = arith.negf %31 : vector<8x256xf32>
    %33 = math.exp %32 : vector<8x256xf32>
    %cst_16 = arith.constant 1.000000e+00 : f32
    %34 = vector.broadcast %cst_16 : f32 to vector<8x256xf32>
    %35 = arith.addf %34, %33 : vector<8x256xf32>
    %36 = arith.divf %34, %35 : vector<8x256xf32>
    %37 = math.tanh %31 : vector<8x256xf32>
    %38 = vector.extract_strided_slice %36 {offsets = [0, 0], sizes = [8, 64], strides = [1, 1]} : vector<8x256xf32> to vector<8x64xf32>
    %39 = vector.extract_strided_slice %36 {offsets = [0, 64], sizes = [8, 64], strides = [1, 1]} : vector<8x256xf32> to vector<8x64xf32>
    %40 = vector.extract_strided_slice %37 {offsets = [0, 128], sizes = [8, 64], strides = [1, 1]} : vector<8x256xf32> to vector<8x64xf32>
    %41 = vector.extract_strided_slice %36 {offsets = [0, 192], sizes = [8, 64], strides = [1, 1]} : vector<8x256xf32> to vector<8x64xf32>
    %42 = arith.mulf %39, %25 : vector<8x64xf32>
    %43 = arith.mulf %38, %40 : vector<8x64xf32>
    %44 = arith.addf %42, %43 : vector<8x64xf32>
    %45 = math.tanh %44 : vector<8x64xf32>
    %46 = arith.mulf %41, %45 : vector<8x64xf32>
    %c8 = arith.constant 8 : index
    %c0_17 = arith.constant 0 : index
    %47 = vector.load %arg12[%c8, %c0_17] : memref<64x64xf32, #tpu.memory_space<vmem>>, vector<8x64xf32>
    tpu.vector_store %arg12[%c8, %c0_17], %46 {strides = array<i32>} : memref<64x64xf32, #tpu.memory_space<vmem>>, vector<8x64xf32>,
    %48 = vector.extract_strided_slice %7 {offsets = [16, 0], sizes = [8, 256], strides = [1, 1]} : vector<64x256xf32> to vector<8x256xf32>
    %cst_18 = arith.constant dense<0.000000e+00> : vector<8x256xf32>
    %49 = tpu.matmul %46, %0, %cst_18 {dimension_numbers = #tpu.dot_dimension_numbers<[1], [0], [0], [1], [0, 0, 1, 1], [], []>} : vector<8x64xf32>, vector<64x256xf32>, vector<8x256xf32> -> vector<8x256xf32>
    %50 = arith.addf %48, %49 : vector<8x256xf32>
    %51 = arith.negf %50 : vector<8x256xf32>
    %52 = math.exp %51 : vector<8x256xf32>
    %cst_19 = arith.constant 1.000000e+00 : f32
    %53 = vector.broadcast %cst_19 : f32 to vector<8x256xf32>
    %54 = arith.addf %53, %52 : vector<8x256xf32>
    %55 = arith.divf %53, %54 : vector<8x256xf32>
    %56 = math.tanh %50 : vector<8x256xf32>
    %57 = vector.extract_strided_slice %55 {offsets = [0, 0], sizes = [8, 64], strides = [1, 1]} : vector<8x256xf32> to vector<8x64xf32>
    %58 = vector.extract_strided_slice %55 {offsets = [0, 64], sizes = [8, 64], strides = [1, 1]} : vector<8x256xf32> to vector<8x64xf32>
    %59 = vector.extract_strided_slice %56 {offsets = [0, 128], sizes = [8, 64], strides = [1, 1]} : vector<8x256xf32> to vector<8x64xf32>
    %60 = vector.extract_strided_slice %55 {offsets = [0, 192], sizes = [8, 64], strides = [1, 1]} : vector<8x256xf32> to vector<8x64xf32>
    %61 = arith.mulf %58, %44 : vector<8x64xf32>
    %62 = arith.mulf %57, %59 : vector<8x64xf32>
    %63 = arith.addf %61, %62 : vector<8x64xf32>
    %64 = math.tanh %63 : vector<8x64xf32>
    %65 = arith.mulf %60, %64 : vector<8x64xf32>
    %c16 = arith.constant 16 : index
    %c0_20 = arith.constant 0 : index
    %66 = vector.load %arg12[%c16, %c0_20] : memref<64x64xf32, #tpu.memory_space<vmem>>, vector<8x64xf32>
    tpu.vector_store %arg12[%c16, %c0_20], %65 {strides = array<i32>} : memref<64x64xf32, #tpu.memory_space<vmem>>, vector<8x64xf32>,
    %67 = vector.extract_strided_slice %7 {offsets = [24, 0], sizes = [8, 256], strides = [1, 1]} : vector<64x256xf32> to vector<8x256xf32>
    %cst_21 = arith.constant dense<0.000000e+00> : vector<8x256xf32>
    %68 = tpu.matmul %65, %0, %cst_21 {dimension_numbers = #tpu.dot_dimension_numbers<[1], [0], [0], [1], [0, 0, 1, 1], [], []>} : vector<8x64xf32>, vector<64x256xf32>, vector<8x256xf32> -> vector<8x256xf32>
    %69 = arith.addf %67, %68 : vector<8x256xf32>
    %70 = arith.negf %69 : vector<8x256xf32>
    %71 = math.exp %70 : vector<8x256xf32>
    %cst_22 = arith.constant 1.000000e+00 : f32
    %72 = vector.broadcast %cst_22 : f32 to vector<8x256xf32>
    %73 = arith.addf %72, %71 : vector<8x256xf32>
    %74 = arith.divf %72, %73 : vector<8x256xf32>
    %75 = math.tanh %69 : vector<8x256xf32>
    %76 = vector.extract_strided_slice %74 {offsets = [0, 0], sizes = [8, 64], strides = [1, 1]} : vector<8x256xf32> to vector<8x64xf32>
    %77 = vector.extract_strided_slice %74 {offsets = [0, 64], sizes = [8, 64], strides = [1, 1]} : vector<8x256xf32> to vector<8x64xf32>
    %78 = vector.extract_strided_slice %75 {offsets = [0, 128], sizes = [8, 64], strides = [1, 1]} : vector<8x256xf32> to vector<8x64xf32>
    %79 = vector.extract_strided_slice %74 {offsets = [0, 192], sizes = [8, 64], strides = [1, 1]} : vector<8x256xf32> to vector<8x64xf32>
    %80 = arith.mulf %77, %63 : vector<8x64xf32>
    %81 = arith.mulf %76, %78 : vector<8x64xf32>
    %82 = arith.addf %80, %81 : vector<8x64xf32>
    %83 = math.tanh %82 : vector<8x64xf32>
    %84 = arith.mulf %79, %83 : vector<8x64xf32>
    %c24 = arith.constant 24 : index
    %c0_23 = arith.constant 0 : index
    %85 = vector.load %arg12[%c24, %c0_23] : memref<64x64xf32, #tpu.memory_space<vmem>>, vector<8x64xf32>
    tpu.vector_store %arg12[%c24, %c0_23], %84 {strides = array<i32>} : memref<64x64xf32, #tpu.memory_space<vmem>>, vector<8x64xf32>,
    %86 = vector.extract_strided_slice %7 {offsets = [32, 0], sizes = [8, 256], strides = [1, 1]} : vector<64x256xf32> to vector<8x256xf32>
    %cst_24 = arith.constant dense<0.000000e+00> : vector<8x256xf32>
    %87 = tpu.matmul %84, %0, %cst_24 {dimension_numbers = #tpu.dot_dimension_numbers<[1], [0], [0], [1], [0, 0, 1, 1], [], []>} : vector<8x64xf32>, vector<64x256xf32>, vector<8x256xf32> -> vector<8x256xf32>
    %88 = arith.addf %86, %87 : vector<8x256xf32>
    %89 = arith.negf %88 : vector<8x256xf32>
    %90 = math.exp %89 : vector<8x256xf32>
    %cst_25 = arith.constant 1.000000e+00 : f32
    %91 = vector.broadcast %cst_25 : f32 to vector<8x256xf32>
    %92 = arith.addf %91, %90 : vector<8x256xf32>
    %93 = arith.divf %91, %92 : vector<8x256xf32>
    %94 = math.tanh %88 : vector<8x256xf32>
    %95 = vector.extract_strided_slice %93 {offsets = [0, 0], sizes = [8, 64], strides = [1, 1]} : vector<8x256xf32> to vector<8x64xf32>
    %96 = vector.extract_strided_slice %93 {offsets = [0, 64], sizes = [8, 64], strides = [1, 1]} : vector<8x256xf32> to vector<8x64xf32>
    %97 = vector.extract_strided_slice %94 {offsets = [0, 128], sizes = [8, 64], strides = [1, 1]} : vector<8x256xf32> to vector<8x64xf32>
    %98 = vector.extract_strided_slice %93 {offsets = [0, 192], sizes = [8, 64], strides = [1, 1]} : vector<8x256xf32> to vector<8x64xf32>
    %99 = arith.mulf %96, %82 : vector<8x64xf32>
    %100 = arith.mulf %95, %97 : vector<8x64xf32>
    %101 = arith.addf %99, %100 : vector<8x64xf32>
    %102 = math.tanh %101 : vector<8x64xf32>
    %103 = arith.mulf %98, %102 : vector<8x64xf32>
    %c32 = arith.constant 32 : index
    %c0_26 = arith.constant 0 : index
    %104 = vector.load %arg12[%c32, %c0_26] : memref<64x64xf32, #tpu.memory_space<vmem>>, vector<8x64xf32>
    tpu.vector_store %arg12[%c32, %c0_26], %103 {strides = array<i32>} : memref<64x64xf32, #tpu.memory_space<vmem>>, vector<8x64xf32>,
    %105 = vector.extract_strided_slice %7 {offsets = [40, 0], sizes = [8, 256], strides = [1, 1]} : vector<64x256xf32> to vector<8x256xf32>
    %cst_27 = arith.constant dense<0.000000e+00> : vector<8x256xf32>
    %106 = tpu.matmul %103, %0, %cst_27 {dimension_numbers = #tpu.dot_dimension_numbers<[1], [0], [0], [1], [0, 0, 1, 1], [], []>} : vector<8x64xf32>, vector<64x256xf32>, vector<8x256xf32> -> vector<8x256xf32>
    %107 = arith.addf %105, %106 : vector<8x256xf32>
    %108 = arith.negf %107 : vector<8x256xf32>
    %109 = math.exp %108 : vector<8x256xf32>
    %cst_28 = arith.constant 1.000000e+00 : f32
    %110 = vector.broadcast %cst_28 : f32 to vector<8x256xf32>
    %111 = arith.addf %110, %109 : vector<8x256xf32>
    %112 = arith.divf %110, %111 : vector<8x256xf32>
    %113 = math.tanh %107 : vector<8x256xf32>
    %114 = vector.extract_strided_slice %112 {offsets = [0, 0], sizes = [8, 64], strides = [1, 1]} : vector<8x256xf32> to vector<8x64xf32>
    %115 = vector.extract_strided_slice %112 {offsets = [0, 64], sizes = [8, 64], strides = [1, 1]} : vector<8x256xf32> to vector<8x64xf32>
    %116 = vector.extract_strided_slice %113 {offsets = [0, 128], sizes = [8, 64], strides = [1, 1]} : vector<8x256xf32> to vector<8x64xf32>
    %117 = vector.extract_strided_slice %112 {offsets = [0, 192], sizes = [8, 64], strides = [1, 1]} : vector<8x256xf32> to vector<8x64xf32>
    %118 = arith.mulf %115, %101 : vector<8x64xf32>
    %119 = arith.mulf %114, %116 : vector<8x64xf32>
    %120 = arith.addf %118, %119 : vector<8x64xf32>
    %121 = math.tanh %120 : vector<8x64xf32>
    %122 = arith.mulf %117, %121 : vector<8x64xf32>
    %c40 = arith.constant 40 : index
    %c0_29 = arith.constant 0 : index
    %123 = vector.load %arg12[%c40, %c0_29] : memref<64x64xf32, #tpu.memory_space<vmem>>, vector<8x64xf32>
    tpu.vector_store %arg12[%c40, %c0_29], %122 {strides = array<i32>} : memref<64x64xf32, #tpu.memory_space<vmem>>, vector<8x64xf32>,
    %124 = vector.extract_strided_slice %7 {offsets = [48, 0], sizes = [8, 256], strides = [1, 1]} : vector<64x256xf32> to vector<8x256xf32>
    %cst_30 = arith.constant dense<0.000000e+00> : vector<8x256xf32>
    %125 = tpu.matmul %122, %0, %cst_30 {dimension_numbers = #tpu.dot_dimension_numbers<[1], [0], [0], [1], [0, 0, 1, 1], [], []>} : vector<8x64xf32>, vector<64x256xf32>, vector<8x256xf32> -> vector<8x256xf32>
    %126 = arith.addf %124, %125 : vector<8x256xf32>
    %127 = arith.negf %126 : vector<8x256xf32>
    %128 = math.exp %127 : vector<8x256xf32>
    %cst_31 = arith.constant 1.000000e+00 : f32
    %129 = vector.broadcast %cst_31 : f32 to vector<8x256xf32>
    %130 = arith.addf %129, %128 : vector<8x256xf32>
    %131 = arith.divf %129, %130 : vector<8x256xf32>
    %132 = math.tanh %126 : vector<8x256xf32>
    %133 = vector.extract_strided_slice %131 {offsets = [0, 0], sizes = [8, 64], strides = [1, 1]} : vector<8x256xf32> to vector<8x64xf32>
    %134 = vector.extract_strided_slice %131 {offsets = [0, 64], sizes = [8, 64], strides = [1, 1]} : vector<8x256xf32> to vector<8x64xf32>
    %135 = vector.extract_strided_slice %132 {offsets = [0, 128], sizes = [8, 64], strides = [1, 1]} : vector<8x256xf32> to vector<8x64xf32>
    %136 = vector.extract_strided_slice %131 {offsets = [0, 192], sizes = [8, 64], strides = [1, 1]} : vector<8x256xf32> to vector<8x64xf32>
    %137 = arith.mulf %134, %120 : vector<8x64xf32>
    %138 = arith.mulf %133, %135 : vector<8x64xf32>
    %139 = arith.addf %137, %138 : vector<8x64xf32>
    %140 = math.tanh %139 : vector<8x64xf32>
    %141 = arith.mulf %136, %140 : vector<8x64xf32>
    %c48 = arith.constant 48 : index
    %c0_32 = arith.constant 0 : index
    %142 = vector.load %arg12[%c48, %c0_32] : memref<64x64xf32, #tpu.memory_space<vmem>>, vector<8x64xf32>
    tpu.vector_store %arg12[%c48, %c0_32], %141 {strides = array<i32>} : memref<64x64xf32, #tpu.memory_space<vmem>>, vector<8x64xf32>,
    %143 = vector.extract_strided_slice %7 {offsets = [56, 0], sizes = [8, 256], strides = [1, 1]} : vector<64x256xf32> to vector<8x256xf32>
    %cst_33 = arith.constant dense<0.000000e+00> : vector<8x256xf32>
    %144 = tpu.matmul %141, %0, %cst_33 {dimension_numbers = #tpu.dot_dimension_numbers<[1], [0], [0], [1], [0, 0, 1, 1], [], []>} : vector<8x64xf32>, vector<64x256xf32>, vector<8x256xf32> -> vector<8x256xf32>
    %145 = arith.addf %143, %144 : vector<8x256xf32>
    %146 = arith.negf %145 : vector<8x256xf32>
    %147 = math.exp %146 : vector<8x256xf32>
    %cst_34 = arith.constant 1.000000e+00 : f32
    %148 = vector.broadcast %cst_34 : f32 to vector<8x256xf32>
    %149 = arith.addf %148, %147 : vector<8x256xf32>
    %150 = arith.divf %148, %149 : vector<8x256xf32>
    %151 = math.tanh %145 : vector<8x256xf32>
    %152 = vector.extract_strided_slice %150 {offsets = [0, 0], sizes = [8, 64], strides = [1, 1]} : vector<8x256xf32> to vector<8x64xf32>
    %153 = vector.extract_strided_slice %150 {offsets = [0, 64], sizes = [8, 64], strides = [1, 1]} : vector<8x256xf32> to vector<8x64xf32>
    %154 = vector.extract_strided_slice %151 {offsets = [0, 128], sizes = [8, 64], strides = [1, 1]} : vector<8x256xf32> to vector<8x64xf32>
    %155 = vector.extract_strided_slice %150 {offsets = [0, 192], sizes = [8, 64], strides = [1, 1]} : vector<8x256xf32> to vector<8x64xf32>
    %156 = arith.mulf %153, %139 : vector<8x64xf32>
    %157 = arith.mulf %152, %154 : vector<8x64xf32>
    %158 = arith.addf %156, %157 : vector<8x64xf32>
    %159 = math.tanh %158 : vector<8x64xf32>
    %160 = arith.mulf %155, %159 : vector<8x64xf32>
    %c56 = arith.constant 56 : index
    %c0_35 = arith.constant 0 : index
    %161 = vector.load %arg12[%c56, %c0_35] : memref<64x64xf32, #tpu.memory_space<vmem>>, vector<8x64xf32>
    tpu.vector_store %arg12[%c56, %c0_35], %160 {strides = array<i32>} : memref<64x64xf32, #tpu.memory_space<vmem>>, vector<8x64xf32>,
    %c0_36 = arith.constant 0 : index
    %c0_37 = arith.constant 0 : index
    %162 = vector.load %arg12[%c0_36, %c0_37] : memref<64x64xf32, #tpu.memory_space<vmem>>, vector<64x64xf32>
    %c0_38 = arith.constant 0 : index
    %c0_39 = arith.constant 0 : index
    %163 = vector.load %arg4[%c0_38, %c0_39] : memref<64x256xf32, #tpu.memory_space<vmem>>, vector<64x256xf32>
    %cst_40 = arith.constant dense<0.000000e+00> : vector<64x256xf32>
    %164 = tpu.matmul %162, %163, %cst_40 {dimension_numbers = #tpu.dot_dimension_numbers<[1], [0], [0], [1], [0, 0, 1, 1], [], []>} : vector<64x64xf32>, vector<64x256xf32>, vector<64x256xf32> -> vector<64x256xf32>
    %c0_41 = arith.constant 0 : index
    %c0_42 = arith.constant 0 : index
    %165 = vector.load %arg6[%c0_41, %c0_42] : memref<1x256xf32, #tpu.memory_space<vmem>>, vector<1x256xf32>
    %166 = vector.broadcast %165 : vector<1x256xf32> to vector<64x256xf32>
    %167 = arith.addf %164, %166 : vector<64x256xf32>
    %cst_43 = arith.constant 0.000000e+00 : f32
    %168 = vector.broadcast %cst_43 : f32 to vector<8x64xf32>
    %cst_44 = arith.constant 0.000000e+00 : f32
    %169 = vector.broadcast %cst_44 : f32 to vector<8x64xf32>
    %170 = vector.extract_strided_slice %167 {offsets = [0, 0], sizes = [8, 256], strides = [1, 1]} : vector<64x256xf32> to vector<8x256xf32>
    %cst_45 = arith.constant dense<0.000000e+00> : vector<8x256xf32>
    %171 = tpu.matmul %168, %1, %cst_45 {dimension_numbers = #tpu.dot_dimension_numbers<[1], [0], [0], [1], [0, 0, 1, 1], [], []>} : vector<8x64xf32>, vector<64x256xf32>, vector<8x256xf32> -> vector<8x256xf32>
    %172 = arith.addf %170, %171 : vector<8x256xf32>
    %173 = arith.negf %172 : vector<8x256xf32>
    %174 = math.exp %173 : vector<8x256xf32>
    %cst_46 = arith.constant 1.000000e+00 : f32
    %175 = vector.broadcast %cst_46 : f32 to vector<8x256xf32>
    %176 = arith.addf %175, %174 : vector<8x256xf32>
    %177 = arith.divf %175, %176 : vector<8x256xf32>
    %178 = math.tanh %172 : vector<8x256xf32>
    %179 = vector.extract_strided_slice %177 {offsets = [0, 0], sizes = [8, 64], strides = [1, 1]} : vector<8x256xf32> to vector<8x64xf32>
    %180 = vector.extract_strided_slice %177 {offsets = [0, 64], sizes = [8, 64], strides = [1, 1]} : vector<8x256xf32> to vector<8x64xf32>
    %181 = vector.extract_strided_slice %178 {offsets = [0, 128], sizes = [8, 64], strides = [1, 1]} : vector<8x256xf32> to vector<8x64xf32>
    %182 = vector.extract_strided_slice %177 {offsets = [0, 192], sizes = [8, 64], strides = [1, 1]} : vector<8x256xf32> to vector<8x64xf32>
    %183 = arith.mulf %180, %169 : vector<8x64xf32>
    %184 = arith.mulf %179, %181 : vector<8x64xf32>
    %185 = arith.addf %183, %184 : vector<8x64xf32>
    %186 = math.tanh %185 : vector<8x64xf32>
    %187 = arith.mulf %182, %186 : vector<8x64xf32>
    %188 = vector.extract_strided_slice %167 {offsets = [8, 0], sizes = [8, 256], strides = [1, 1]} : vector<64x256xf32> to vector<8x256xf32>
    %cst_47 = arith.constant dense<0.000000e+00> : vector<8x256xf32>
    %189 = tpu.matmul %187, %1, %cst_47 {dimension_numbers = #tpu.dot_dimension_numbers<[1], [0], [0], [1], [0, 0, 1, 1], [], []>} : vector<8x64xf32>, vector<64x256xf32>, vector<8x256xf32> -> vector<8x256xf32>
    %190 = arith.addf %188, %189 : vector<8x256xf32>
    %191 = arith.negf %190 : vector<8x256xf32>
    %192 = math.exp %191 : vector<8x256xf32>
    %cst_48 = arith.constant 1.000000e+00 : f32
    %193 = vector.broadcast %cst_48 : f32 to vector<8x256xf32>
    %194 = arith.addf %193, %192 : vector<8x256xf32>
    %195 = arith.divf %193, %194 : vector<8x256xf32>
    %196 = math.tanh %190 : vector<8x256xf32>
    %197 = vector.extract_strided_slice %195 {offsets = [0, 0], sizes = [8, 64], strides = [1, 1]} : vector<8x256xf32> to vector<8x64xf32>
    %198 = vector.extract_strided_slice %195 {offsets = [0, 64], sizes = [8, 64], strides = [1, 1]} : vector<8x256xf32> to vector<8x64xf32>
    %199 = vector.extract_strided_slice %196 {offsets = [0, 128], sizes = [8, 64], strides = [1, 1]} : vector<8x256xf32> to vector<8x64xf32>
    %200 = vector.extract_strided_slice %195 {offsets = [0, 192], sizes = [8, 64], strides = [1, 1]} : vector<8x256xf32> to vector<8x64xf32>
    %201 = arith.mulf %198, %185 : vector<8x64xf32>
    %202 = arith.mulf %197, %199 : vector<8x64xf32>
    %203 = arith.addf %201, %202 : vector<8x64xf32>
    %204 = math.tanh %203 : vector<8x64xf32>
    %205 = arith.mulf %200, %204 : vector<8x64xf32>
    %206 = vector.extract_strided_slice %167 {offsets = [16, 0], sizes = [8, 256], strides = [1, 1]} : vector<64x256xf32> to vector<8x256xf32>
    %cst_49 = arith.constant dense<0.000000e+00> : vector<8x256xf32>
    %207 = tpu.matmul %205, %1, %cst_49 {dimension_numbers = #tpu.dot_dimension_numbers<[1], [0], [0], [1], [0, 0, 1, 1], [], []>} : vector<8x64xf32>, vector<64x256xf32>, vector<8x256xf32> -> vector<8x256xf32>
    %208 = arith.addf %206, %207 : vector<8x256xf32>
    %209 = arith.negf %208 : vector<8x256xf32>
    %210 = math.exp %209 : vector<8x256xf32>
    %cst_50 = arith.constant 1.000000e+00 : f32
    %211 = vector.broadcast %cst_50 : f32 to vector<8x256xf32>
    %212 = arith.addf %211, %210 : vector<8x256xf32>
    %213 = arith.divf %211, %212 : vector<8x256xf32>
    %214 = math.tanh %208 : vector<8x256xf32>
    %215 = vector.extract_strided_slice %213 {offsets = [0, 0], sizes = [8, 64], strides = [1, 1]} : vector<8x256xf32> to vector<8x64xf32>
    %216 = vector.extract_strided_slice %213 {offsets = [0, 64], sizes = [8, 64], strides = [1, 1]} : vector<8x256xf32> to vector<8x64xf32>
    %217 = vector.extract_strided_slice %214 {offsets = [0, 128], sizes = [8, 64], strides = [1, 1]} : vector<8x256xf32> to vector<8x64xf32>
    %218 = vector.extract_strided_slice %213 {offsets = [0, 192], sizes = [8, 64], strides = [1, 1]} : vector<8x256xf32> to vector<8x64xf32>
    %219 = arith.mulf %216, %203 : vector<8x64xf32>
    %220 = arith.mulf %215, %217 : vector<8x64xf32>
    %221 = arith.addf %219, %220 : vector<8x64xf32>
    %222 = math.tanh %221 : vector<8x64xf32>
    %223 = arith.mulf %218, %222 : vector<8x64xf32>
    %224 = vector.extract_strided_slice %167 {offsets = [24, 0], sizes = [8, 256], strides = [1, 1]} : vector<64x256xf32> to vector<8x256xf32>
    %cst_51 = arith.constant dense<0.000000e+00> : vector<8x256xf32>
    %225 = tpu.matmul %223, %1, %cst_51 {dimension_numbers = #tpu.dot_dimension_numbers<[1], [0], [0], [1], [0, 0, 1, 1], [], []>} : vector<8x64xf32>, vector<64x256xf32>, vector<8x256xf32> -> vector<8x256xf32>
    %226 = arith.addf %224, %225 : vector<8x256xf32>
    %227 = arith.negf %226 : vector<8x256xf32>
    %228 = math.exp %227 : vector<8x256xf32>
    %cst_52 = arith.constant 1.000000e+00 : f32
    %229 = vector.broadcast %cst_52 : f32 to vector<8x256xf32>
    %230 = arith.addf %229, %228 : vector<8x256xf32>
    %231 = arith.divf %229, %230 : vector<8x256xf32>
    %232 = math.tanh %226 : vector<8x256xf32>
    %233 = vector.extract_strided_slice %231 {offsets = [0, 0], sizes = [8, 64], strides = [1, 1]} : vector<8x256xf32> to vector<8x64xf32>
    %234 = vector.extract_strided_slice %231 {offsets = [0, 64], sizes = [8, 64], strides = [1, 1]} : vector<8x256xf32> to vector<8x64xf32>
    %235 = vector.extract_strided_slice %232 {offsets = [0, 128], sizes = [8, 64], strides = [1, 1]} : vector<8x256xf32> to vector<8x64xf32>
    %236 = vector.extract_strided_slice %231 {offsets = [0, 192], sizes = [8, 64], strides = [1, 1]} : vector<8x256xf32> to vector<8x64xf32>
    %237 = arith.mulf %234, %221 : vector<8x64xf32>
    %238 = arith.mulf %233, %235 : vector<8x64xf32>
    %239 = arith.addf %237, %238 : vector<8x64xf32>
    %240 = math.tanh %239 : vector<8x64xf32>
    %241 = arith.mulf %236, %240 : vector<8x64xf32>
    %242 = vector.extract_strided_slice %167 {offsets = [32, 0], sizes = [8, 256], strides = [1, 1]} : vector<64x256xf32> to vector<8x256xf32>
    %cst_53 = arith.constant dense<0.000000e+00> : vector<8x256xf32>
    %243 = tpu.matmul %241, %1, %cst_53 {dimension_numbers = #tpu.dot_dimension_numbers<[1], [0], [0], [1], [0, 0, 1, 1], [], []>} : vector<8x64xf32>, vector<64x256xf32>, vector<8x256xf32> -> vector<8x256xf32>
    %244 = arith.addf %242, %243 : vector<8x256xf32>
    %245 = arith.negf %244 : vector<8x256xf32>
    %246 = math.exp %245 : vector<8x256xf32>
    %cst_54 = arith.constant 1.000000e+00 : f32
    %247 = vector.broadcast %cst_54 : f32 to vector<8x256xf32>
    %248 = arith.addf %247, %246 : vector<8x256xf32>
    %249 = arith.divf %247, %248 : vector<8x256xf32>
    %250 = math.tanh %244 : vector<8x256xf32>
    %251 = vector.extract_strided_slice %249 {offsets = [0, 0], sizes = [8, 64], strides = [1, 1]} : vector<8x256xf32> to vector<8x64xf32>
    %252 = vector.extract_strided_slice %249 {offsets = [0, 64], sizes = [8, 64], strides = [1, 1]} : vector<8x256xf32> to vector<8x64xf32>
    %253 = vector.extract_strided_slice %250 {offsets = [0, 128], sizes = [8, 64], strides = [1, 1]} : vector<8x256xf32> to vector<8x64xf32>
    %254 = vector.extract_strided_slice %249 {offsets = [0, 192], sizes = [8, 64], strides = [1, 1]} : vector<8x256xf32> to vector<8x64xf32>
    %255 = arith.mulf %252, %239 : vector<8x64xf32>
    %256 = arith.mulf %251, %253 : vector<8x64xf32>
    %257 = arith.addf %255, %256 : vector<8x64xf32>
    %258 = math.tanh %257 : vector<8x64xf32>
    %259 = arith.mulf %254, %258 : vector<8x64xf32>
    %260 = vector.extract_strided_slice %167 {offsets = [40, 0], sizes = [8, 256], strides = [1, 1]} : vector<64x256xf32> to vector<8x256xf32>
    %cst_55 = arith.constant dense<0.000000e+00> : vector<8x256xf32>
    %261 = tpu.matmul %259, %1, %cst_55 {dimension_numbers = #tpu.dot_dimension_numbers<[1], [0], [0], [1], [0, 0, 1, 1], [], []>} : vector<8x64xf32>, vector<64x256xf32>, vector<8x256xf32> -> vector<8x256xf32>
    %262 = arith.addf %260, %261 : vector<8x256xf32>
    %263 = arith.negf %262 : vector<8x256xf32>
    %264 = math.exp %263 : vector<8x256xf32>
    %cst_56 = arith.constant 1.000000e+00 : f32
    %265 = vector.broadcast %cst_56 : f32 to vector<8x256xf32>
    %266 = arith.addf %265, %264 : vector<8x256xf32>
    %267 = arith.divf %265, %266 : vector<8x256xf32>
    %268 = math.tanh %262 : vector<8x256xf32>
    %269 = vector.extract_strided_slice %267 {offsets = [0, 0], sizes = [8, 64], strides = [1, 1]} : vector<8x256xf32> to vector<8x64xf32>
    %270 = vector.extract_strided_slice %267 {offsets = [0, 64], sizes = [8, 64], strides = [1, 1]} : vector<8x256xf32> to vector<8x64xf32>
    %271 = vector.extract_strided_slice %268 {offsets = [0, 128], sizes = [8, 64], strides = [1, 1]} : vector<8x256xf32> to vector<8x64xf32>
    %272 = vector.extract_strided_slice %267 {offsets = [0, 192], sizes = [8, 64], strides = [1, 1]} : vector<8x256xf32> to vector<8x64xf32>
    %273 = arith.mulf %270, %257 : vector<8x64xf32>
    %274 = arith.mulf %269, %271 : vector<8x64xf32>
    %275 = arith.addf %273, %274 : vector<8x64xf32>
    %276 = math.tanh %275 : vector<8x64xf32>
    %277 = arith.mulf %272, %276 : vector<8x64xf32>
    %278 = vector.extract_strided_slice %167 {offsets = [48, 0], sizes = [8, 256], strides = [1, 1]} : vector<64x256xf32> to vector<8x256xf32>
    %cst_57 = arith.constant dense<0.000000e+00> : vector<8x256xf32>
    %279 = tpu.matmul %277, %1, %cst_57 {dimension_numbers = #tpu.dot_dimension_numbers<[1], [0], [0], [1], [0, 0, 1, 1], [], []>} : vector<8x64xf32>, vector<64x256xf32>, vector<8x256xf32> -> vector<8x256xf32>
    %280 = arith.addf %278, %279 : vector<8x256xf32>
    %281 = arith.negf %280 : vector<8x256xf32>
    %282 = math.exp %281 : vector<8x256xf32>
    %cst_58 = arith.constant 1.000000e+00 : f32
    %283 = vector.broadcast %cst_58 : f32 to vector<8x256xf32>
    %284 = arith.addf %283, %282 : vector<8x256xf32>
    %285 = arith.divf %283, %284 : vector<8x256xf32>
    %286 = math.tanh %280 : vector<8x256xf32>
    %287 = vector.extract_strided_slice %285 {offsets = [0, 0], sizes = [8, 64], strides = [1, 1]} : vector<8x256xf32> to vector<8x64xf32>
    %288 = vector.extract_strided_slice %285 {offsets = [0, 64], sizes = [8, 64], strides = [1, 1]} : vector<8x256xf32> to vector<8x64xf32>
    %289 = vector.extract_strided_slice %286 {offsets = [0, 128], sizes = [8, 64], strides = [1, 1]} : vector<8x256xf32> to vector<8x64xf32>
    %290 = vector.extract_strided_slice %285 {offsets = [0, 192], sizes = [8, 64], strides = [1, 1]} : vector<8x256xf32> to vector<8x64xf32>
    %291 = arith.mulf %288, %275 : vector<8x64xf32>
    %292 = arith.mulf %287, %289 : vector<8x64xf32>
    %293 = arith.addf %291, %292 : vector<8x64xf32>
    %294 = math.tanh %293 : vector<8x64xf32>
    %295 = arith.mulf %290, %294 : vector<8x64xf32>
    %296 = vector.extract_strided_slice %167 {offsets = [56, 0], sizes = [8, 256], strides = [1, 1]} : vector<64x256xf32> to vector<8x256xf32>
    %cst_59 = arith.constant dense<0.000000e+00> : vector<8x256xf32>
    %297 = tpu.matmul %295, %1, %cst_59 {dimension_numbers = #tpu.dot_dimension_numbers<[1], [0], [0], [1], [0, 0, 1, 1], [], []>} : vector<8x64xf32>, vector<64x256xf32>, vector<8x256xf32> -> vector<8x256xf32>
    %298 = arith.addf %296, %297 : vector<8x256xf32>
    %299 = arith.negf %298 : vector<8x256xf32>
    %300 = math.exp %299 : vector<8x256xf32>
    %cst_60 = arith.constant 1.000000e+00 : f32
    %301 = vector.broadcast %cst_60 : f32 to vector<8x256xf32>
    %302 = arith.addf %301, %300 : vector<8x256xf32>
    %303 = arith.divf %301, %302 : vector<8x256xf32>
    %304 = math.tanh %298 : vector<8x256xf32>
    %305 = vector.extract_strided_slice %303 {offsets = [0, 0], sizes = [8, 64], strides = [1, 1]} : vector<8x256xf32> to vector<8x64xf32>
    %306 = vector.extract_strided_slice %303 {offsets = [0, 64], sizes = [8, 64], strides = [1, 1]} : vector<8x256xf32> to vector<8x64xf32>
    %307 = vector.extract_strided_slice %304 {offsets = [0, 128], sizes = [8, 64], strides = [1, 1]} : vector<8x256xf32> to vector<8x64xf32>
    %308 = vector.extract_strided_slice %303 {offsets = [0, 192], sizes = [8, 64], strides = [1, 1]} : vector<8x256xf32> to vector<8x64xf32>
    %309 = arith.mulf %306, %293 : vector<8x64xf32>
    %310 = arith.mulf %305, %307 : vector<8x64xf32>
    %311 = arith.addf %309, %310 : vector<8x64xf32>
    %312 = math.tanh %311 : vector<8x64xf32>
    %313 = arith.mulf %308, %312 : vector<8x64xf32>
    %c0_61 = arith.constant 0 : index
    %c0_62 = arith.constant 0 : index
    %314 = vector.load %arg7[%c0_61, %c0_62] : memref<64x32xf32, #tpu.memory_space<vmem>>, vector<64x32xf32>
    %cst_63 = arith.constant dense<0.000000e+00> : vector<8x32xf32>
    %315 = tpu.matmul %313, %314, %cst_63 {dimension_numbers = #tpu.dot_dimension_numbers<[1], [0], [0], [1], [0, 0, 1, 1], [], []>} : vector<8x64xf32>, vector<64x32xf32>, vector<8x32xf32> -> vector<8x32xf32>
    %c0_64 = arith.constant 0 : index
    %c0_65 = arith.constant 0 : index
    %316 = vector.load %arg8[%c0_64, %c0_65] : memref<1x32xf32, #tpu.memory_space<vmem>>, vector<1x32xf32>
    %317 = vector.broadcast %316 : vector<1x32xf32> to vector<8x32xf32>
    %318 = arith.addf %315, %317 : vector<8x32xf32>
    %cst_66 = arith.constant 0.000000e+00 : f32
    %319 = vector.broadcast %cst_66 : f32 to vector<8x32xf32>
    %320 = arith.maximumf %318, %319 : vector<8x32xf32>
    %c0_67 = arith.constant 0 : index
    %c0_68 = arith.constant 0 : index
    %321 = vector.load %arg9[%c0_67, %c0_68] : memref<32x4xf32, #tpu.memory_space<vmem>>, vector<32x4xf32>
    %cst_69 = arith.constant dense<0.000000e+00> : vector<8x4xf32>
    %322 = tpu.matmul %320, %321, %cst_69 {dimension_numbers = #tpu.dot_dimension_numbers<[1], [0], [0], [1], [0, 0, 1, 1], [], []>} : vector<8x32xf32>, vector<32x4xf32>, vector<8x4xf32> -> vector<8x4xf32>
    %c0_70 = arith.constant 0 : index
    %c0_71 = arith.constant 0 : index
    %323 = vector.load %arg10[%c0_70, %c0_71] : memref<1x4xf32, #tpu.memory_space<vmem>>, vector<1x4xf32>
    %324 = vector.broadcast %323 : vector<1x4xf32> to vector<8x4xf32>
    %325 = arith.addf %322, %324 : vector<8x4xf32>
    %c0_72 = arith.constant 0 : index
    %c0_73 = arith.constant 0 : index
    %326 = vector.load %arg11[%c0_72, %c0_73] : memref<8x4xf32, #tpu.memory_space<vmem>>, vector<8x4xf32>
    tpu.vector_store %arg11[%c0_72, %c0_73], %325 {strides = array<i32>} : memref<8x4xf32, #tpu.memory_space<vmem>>, vector<8x4xf32>,
    return
  }
}

</mosaic_0001>

<llo_original>
// kernel: tpu_custom_call.1
$region0: #{tpu_custom_call.1}
  #allocation0 [shape = 'u32[]', space=smem, size = 0x4, offset = 0x4, fixed_abs, tag = 'smem constant byte address 0x4 - core index']
  #allocation1 [shape = 'u32[72,128]{1,0:T(1,128)}', space=vmem, size = 0x9000, scoped, tag = 'internal scratch']
  #allocation2 [shape = 'f32[64,64]{1,0:T(8,128)}', space=vmem, size = 0x8000, scoped, tag = 'scratch operand']
  %s0 = inlined_call_operand.vmem [shape: f32[64,16], index: 0, kind: input, shape index: {}]
  %s1 = inlined_call_operand.vmem [shape: f32[16,256], index: 1, kind: input, shape index: {}]
  %s2 = inlined_call_operand.vmem [shape: f32[64,256], index: 2, kind: input, shape index: {}]
  %s3 = inlined_call_operand.vmem [shape: f32[1,256], index: 3, kind: input, shape index: {}]
  %s4 = inlined_call_operand.hbm [shape: f32[64,256], index: 4, kind: input, shape index: {}]
  %s5 = inlined_call_operand.hbm [shape: f32[64,256], index: 5, kind: input, shape index: {}]
  %s6 = inlined_call_operand.vmem [shape: f32[1,256], index: 6, kind: input, shape index: {}]
  %s7 = inlined_call_operand.vmem [shape: f32[64,32], index: 7, kind: input, shape index: {}]
  %s8 = inlined_call_operand.vmem [shape: f32[1,32], index: 8, kind: input, shape index: {}]
  %s9 = inlined_call_operand.vmem [shape: f32[32,4], index: 9, kind: input, shape index: {}]
  %s10 = inlined_call_operand.vmem [shape: f32[1,4], index: 10, kind: input, shape index: {}]
  %s11 = inlined_call_operand.vmem [shape: f32[8,4], index: 11, kind: output, shape index: {}]
  %s12 = sld [smem:[#allocation0]]
  $region62: #{tpu_custom_call.1} parent=0
    _
  %s14 = ssub.s32 1, %s12
  %s15 = scalar_select 0, %s14, %s12
  $region1: #{tpu_custom_call.1} parent=0
    #allocation3 [shape = 'u8[65536]{0}', space=vmem, size = 0x10000, scoped, tag = 'input window, operand 4, single buffered']
    #allocation4 [shape = 's32[1]{0}', space=sflag, size = 0x4, scoped, tag = 'scoped memory for tpu_custom_call.1']
    #allocation5 [shape = 'u8[65536]{0}', space=vmem, size = 0x10000, scoped, tag = 'input window, operand 5, single buffered']
    #allocation6 [shape = 's32[1]{0}', space=sflag, size = 0x4, scoped, tag = 'scoped memory for tpu_custom_call.1']
    %16 = vsyncpa [#allocation4], 0
    %17 = vsyncpa [#allocation6], 0
    // Predicated region
    $region2: #{tpu_custom_call.1} parent=1 // pred_check
      _
    $region3: #{tpu_custom_call.1} parent=1 // pred_check_branch
      %19 = sbr.rel (0) target = $region5
    $region4: #{tpu_custom_call.1} parent=1 // pred_region
      _
    $region5: #{tpu_custom_call.1} parent=1 // pred_fallthru
      _
    // Predicated region
    $region6: #{tpu_custom_call.1} parent=1 // pred_check
      _
    $region7: #{tpu_custom_call.1} parent=1 // pred_check_branch
      %21 = sbr.rel (0) target = $region9
    $region8: #{tpu_custom_call.1} parent=1 // pred_region
      _
    $region9: #{tpu_custom_call.1} parent=1 // pred_fallthru
      _
    // Predicated region
    $region10: #{tpu_custom_call.1} parent=1 // pred_check
      _
    $region11: #{tpu_custom_call.1} parent=1 // pred_check_branch
      %23 = sbr.rel (0) target = $region13
    $region12: #{tpu_custom_call.1} parent=1 // pred_region
      _
    $region13: #{tpu_custom_call.1} parent=1 // pred_fallthru
      _
    // Predicated region
    $region14: #{tpu_custom_call.1} parent=1 // pred_check
      _
    $region15: #{tpu_custom_call.1} parent=1 // pred_check_branch
      %25 = sbr.rel (0) target = $region17
    $region16: #{tpu_custom_call.1} parent=1 // pred_region
      _
    $region17: #{tpu_custom_call.1} parent=1 // pred_fallthru
      _
    // Predicated region
    $region18: #{tpu_custom_call.1} parent=1 // pred_check
      _
    $region19: #{tpu_custom_call.1} parent=1 // pred_check_branch
      %27 = sbr.rel (0) target = $region21
    $region20: #{tpu_custom_call.1} parent=1 // pred_region
      %29 = vsyncadd [#allocation4], 0
      %s30 = sshll.u32 %s4, 4
      %s31 = int_to_ptr.hbm [resolvable:$true] %s30
      %s32 = sshll.u32 [#allocation3], 4
      %s33 = int_to_ptr.vmem [resolvable:$true] %s32
      %38 = dma.hbm_to_vmem [thread:$0]  %s31, 2048, %s33, [#allocation4], 256, 256, 16
    $region21: #{tpu_custom_call.1} parent=1 // pred_fallthru
      _
    // Predicated region
    $region22: #{tpu_custom_call.1} parent=1 // pred_check
      _
    $region23: #{tpu_custom_call.1} parent=1 // pred_check_branch
      %40 = sbr.rel (0) target = $region25
    $region24: #{tpu_custom_call.1} parent=1 // pred_region
      %42 = vsyncadd [#allocation6], 0
      %s43 = sshll.u32 %s5, 4
      %s44 = int_to_ptr.hbm [resolvable:$true] %s43
      %s45 = sshll.u32 [#allocation5], 4
      %s46 = int_to_ptr.vmem [resolvable:$true] %s45
      %51 = dma.hbm_to_vmem [thread:$0]  %s44, 2048, %s46, [#allocation6], 256, 256, 16
    $region25: #{tpu_custom_call.1} parent=1 // pred_fallthru
      _
    // Predicated region
    $region26: #{tpu_custom_call.1} parent=1 // pred_check
      _
    $region27: #{tpu_custom_call.1} parent=1 // pred_check_branch
      %53 = sbr.rel (0) target = $region29
    $region28: #{tpu_custom_call.1} parent=1 // pred_region
      _
    $region29: #{tpu_custom_call.1} parent=1 // pred_fallthru
      _
    // Predicated region
    $region30: #{tpu_custom_call.1} parent=1 // pred_check
      _
    $region31: #{tpu_custom_call.1} parent=1 // pred_check_branch
      %55 = sbr.rel (0) target = $region33
    $region32: #{tpu_custom_call.1} parent=1 // pred_region
      _
    $region33: #{tpu_custom_call.1} parent=1 // pred_fallthru
      _
    // Predicated region
    $region34: #{tpu_custom_call.1} parent=1 // pred_check
      _
    $region35: #{tpu_custom_call.1} parent=1 // pred_check_branch
      %57 = sbr.rel (0) target = $region37
    $region36: #{tpu_custom_call.1} parent=1 // pred_region
      _
    $region37: #{tpu_custom_call.1} parent=1 // pred_fallthru
      _
    // Predicated region
    $region38: #{tpu_custom_call.1} parent=1 // pred_check
      _
    $region39: #{tpu_custom_call.1} parent=1 // pred_check_branch
      %59 = sbr.rel (0) target = $region41
    $region40: #{tpu_custom_call.1} parent=1 // pred_region
      _
    $region41: #{tpu_custom_call.1} parent=1 // pred_fallthru
      _
    // Predicated region
    $region42: #{tpu_custom_call.1} parent=1 // pred_check
      _
    $region43: #{tpu_custom_call.1} parent=1 // pred_check_branch
      %61 = sbr.rel (0) target = $region45
    $region44: #{tpu_custom_call.1} parent=1 // pred_region
      _
    $region45: #{tpu_custom_call.1} parent=1 // pred_fallthru
      _
    // Predicated region
    $region46: #{tpu_custom_call.1} parent=1 // pred_check
      _
    $region47: #{tpu_custom_call.1} parent=1 // pred_check_branch
      %63 = sbr.rel (0) target = $region49
    $region48: #{tpu_custom_call.1} parent=1 // pred_region
      %65 = dma.done [#allocation4], 2048
    $region49: #{tpu_custom_call.1} parent=1 // pred_fallthru
      _
    // Predicated region
    $region50: #{tpu_custom_call.1} parent=1 // pred_check
      _
    $region51: #{tpu_custom_call.1} parent=1 // pred_check_branch
      %67 = sbr.rel (0) target = $region53
    $region52: #{tpu_custom_call.1} parent=1 // pred_region
      %69 = dma.done [#allocation6], 2048
    $region53: #{tpu_custom_call.1} parent=1 // pred_fallthru
      _
    %v70 = vld [vmem:[%s2] sm:$0xff]
    %v71 = vld [vmem:[%s2 + $0x8] sm:$0xff]
    %v72 = vld [vmem:[%s2 + $0x10] sm:$0xff]
    %v73 = vld [vmem:[%s2 + $0x18] sm:$0xff]
    %v74 = vld [vmem:[%s2 + $0x20] sm:$0xff]
    %v75 = vld [vmem:[%s2 + $0x28] sm:$0xff]
    %v76 = vld [vmem:[%s2 + $0x30] sm:$0xff]
    %v77 = vld [vmem:[%s2 + $0x38] sm:$0xff]
    %v78 = vld [vmem:[%s2 + $0x40] sm:$0xff]
    %v79 = vld [vmem:[%s2 + $0x48] sm:$0xff]
    %v80 = vld [vmem:[%s2 + $0x50] sm:$0xff]
    %v81 = vld [vmem:[%s2 + $0x58] sm:$0xff]
    %v82 = vld [vmem:[%s2 + $0x60] sm:$0xff]
    %v83 = vld [vmem:[%s2 + $0x68] sm:$0xff]
    %v84 = vld [vmem:[%s2 + $0x70] sm:$0xff]
    %v85 = vld [vmem:[%s2 + $0x78] sm:$0xff]
    %v86 = vld [vmem:[#allocation5] sm:$0xff]
    %v87 = vld [vmem:[#allocation5 + $0x8] sm:$0xff]
    %v88 = vld [vmem:[#allocation5 + $0x10] sm:$0xff]
    %v89 = vld [vmem:[#allocation5 + $0x18] sm:$0xff]
    %v90 = vld [vmem:[#allocation5 + $0x20] sm:$0xff]
    %v91 = vld [vmem:[#allocation5 + $0x28] sm:$0xff]
    %v92 = vld [vmem:[#allocation5 + $0x30] sm:$0xff]
    %v93 = vld [vmem:[#allocation5 + $0x38] sm:$0xff]
    %v94 = vld [vmem:[#allocation5 + $0x40] sm:$0xff]
    %v95 = vld [vmem:[#allocation5 + $0x48] sm:$0xff]
    %v96 = vld [vmem:[#allocation5 + $0x50] sm:$0xff]
    %v97 = vld [vmem:[#allocation5 + $0x58] sm:$0xff]
    %v98 = vld [vmem:[#allocation5 + $0x60] sm:$0xff]
    %v99 = vld [vmem:[#allocation5 + $0x68] sm:$0xff]
    %v100 = vld [vmem:[#allocation5 + $0x70] sm:$0xff]
    %v101 = vld [vmem:[#allocation5 + $0x78] sm:$0xff]
    %v102 = vld [vmem:[%s0] sm:$0xff]
    %v103 = vld [vmem:[%s0 + $0x8] sm:$0xff]
    %v104 = vld [vmem:[%s0 + $0x10] sm:$0xff]
    %v105 = vld [vmem:[%s0 + $0x18] sm:$0xff]
    %v106 = vld [vmem:[%s0 + $0x20] sm:$0xff]
    %v107 = vld [vmem:[%s0 + $0x28] sm:$0xff]
    %v108 = vld [vmem:[%s0 + $0x30] sm:$0xff]
    %v109 = vld [vmem:[%s0 + $0x38] sm:$0xff]
    %v110 = vld [vmem:[%s1] sm:$0xff]
    %v111 = vld [vmem:[%s1 + $0x8] sm:$0xff]
    %v112 = vld [vmem:[%s1 + $0x10] sm:$0xff]
    %v113 = vld [vmem:[%s1 + $0x18] sm:$0xff]
    %v114 = vld [vmem:[%s3] sm:$0x3]
    %v116 = vperm.slane %v114, 0
    %v117 = vperm.slane %v114, 1
    %vm120 = vcmask 130048
    %v122 = vsel %vm120, %v102, 0
    %v125 = vsel %vm120, %v103, 0
    %v128 = vsel %vm120, %v104, 0
    %v131 = vsel %vm120, %v105, 0
    %v134 = vsel %vm120, %v106, 0
    %v137 = vsel %vm120, %v107, 0
    %v140 = vsel %vm120, %v108, 0
    %v143 = vsel %vm120, %v109, 0
    %145 = vmatpush.msra.mxu0 0.0
    %146 = vmatpush.msra.mxu0 0.0
    %147 = vmatpush.msra.mxu0 0.0
    %148 = vmatpush.msra.mxu0 0.0
    %149 = vmatpush.msra.mxu0 0.0
    %150 = vmatpush.msra.mxu0 0.0
    %151 = vmatpush.msra.mxu0 0.0
    %152 = vmatpush.msra.mxu0 0.0
    %153 = vmatpush.msra.mxu0 0.0
    %154 = vmatpush.msra.mxu0 0.0
    %155 = vmatpush.msra.mxu0 0.0
    %156 = vmatpush.msra.mxu0 0.0
    %157 = vmatpush.msra.mxu0 0.0
    %158 = vmatpush.msra.mxu0 0.0
    %159 = vmatpush.msra.mxu0 %v112
    %160 = vmatpush.msra.mxu0 %v110
    %161 = vmatmul.f32.gmra.mxu0 %v122
    %v162 = vpop.f32.mrf.mxu0
    %v163 = vadd.f32 %v116, %v162
    %164 = vmatmul.f32.gmra.mxu0 %v125
    %v165 = vpop.f32.mrf.mxu0
    %v166 = vadd.f32 %v116, %v165
    %167 = vmatmul.f32.gmra.mxu0 %v128
    %v168 = vpop.f32.mrf.mxu0
    %v169 = vadd.f32 %v116, %v168
    %170 = vmatmul.f32.gmra.mxu0 %v131
    %v171 = vpop.f32.mrf.mxu0
    %v172 = vadd.f32 %v116, %v171
    %173 = vmatmul.f32.gmra.mxu0 %v134
    %v174 = vpop.f32.mrf.mxu0
    %v175 = vadd.f32 %v116, %v174
    %176 = vmatmul.f32.gmra.mxu0 %v137
    %v177 = vpop.f32.mrf.mxu0
    %v178 = vadd.f32 %v116, %v177
    %179 = vmatmul.f32.gmra.mxu0 %v140
    %v180 = vpop.f32.mrf.mxu0
    %v181 = vadd.f32 %v116, %v180
    %182 = vmatmul.f32.gmra.mxu0 %v143
    %v183 = vpop.f32.mrf.mxu0
    %v184 = vadd.f32 %v116, %v183
    %185 = vdwg.mxu0
    %186 = vmatpush.msra.mxu0 0.0
    %187 = vmatpush.msra.mxu0 0.0
    %188 = vmatpush.msra.mxu0 0.0
    %189 = vmatpush.msra.mxu0 0.0
    %190 = vmatpush.msra.mxu0 0.0
    %191 = vmatpush.msra.mxu0 0.0
    %192 = vmatpush.msra.mxu0 0.0
    %193 = vmatpush.msra.mxu0 0.0
    %194 = vmatpush.msra.mxu0 0.0
    %195 = vmatpush.msra.mxu0 0.0
    %196 = vmatpush.msra.mxu0 0.0
    %197 = vmatpush.msra.mxu0 0.0
    %198 = vmatpush.msra.mxu0 0.0
    %199 = vmatpush.msra.mxu0 0.0
    %200 = vmatpush.msra.mxu0 %v113
    %201 = vmatpush.msra.mxu0 %v111
    %202 = vmatmul.f32.gmra.mxu0 %v122
    %v203 = vpop.f32.mrf.mxu0
    %v204 = vadd.f32 %v117, %v203
    %205 = vmatmul.f32.gmra.mxu0 %v125
    %v206 = vpop.f32.mrf.mxu0
    %v207 = vadd.f32 %v117, %v206
    %208 = vmatmul.f32.gmra.mxu0 %v128
    %v209 = vpop.f32.mrf.mxu0
    %v210 = vadd.f32 %v117, %v209
    %211 = vmatmul.f32.gmra.mxu0 %v131
    %v212 = vpop.f32.mrf.mxu0
    %v213 = vadd.f32 %v117, %v212
    %214 = vmatmul.f32.gmra.mxu0 %v134
    %v215 = vpop.f32.mrf.mxu0
    %v216 = vadd.f32 %v117, %v215
    %217 = vmatmul.f32.gmra.mxu0 %v137
    %v218 = vpop.f32.mrf.mxu0
    %v219 = vadd.f32 %v117, %v218
    %220 = vmatmul.f32.gmra.mxu0 %v140
    %v221 = vpop.f32.mrf.mxu0
    %v222 = vadd.f32 %v117, %v221
    %223 = vmatmul.f32.gmra.mxu0 %v143
    %v224 = vpop.f32.mrf.mxu0
    %v225 = vadd.f32 %v117, %v224
    %226 = vdwg.mxu0
    %vm227 = vcmask 523264
    %v229 = vsel %vm227, 0.0, 0
    %231 = vmatpush.msra.mxu0 0.0
    %232 = vmatpush.msra.mxu0 0.0
    %233 = vmatpush.msra.mxu0 0.0
    %234 = vmatpush.msra.mxu0 0.0
    %235 = vmatpush.msra.mxu0 0.0
    %236 = vmatpush.msra.mxu0 0.0
    %237 = vmatpush.msra.mxu0 0.0
    %238 = vmatpush.msra.mxu0 0.0
    %239 = vmatpush.msra.mxu0 %v84
    %240 = vmatpush.msra.mxu0 %v82
    %241 = vmatpush.msra.mxu0 %v80
    %242 = vmatpush.msra.mxu0 %v78
    %243 = vmatpush.msra.mxu0 %v76
    %244 = vmatpush.msra.mxu0 %v74
    %245 = vmatpush.msra.mxu0 %v72
    %246 = vmatpush.msra.mxu0 %v70
    %247 = vmatmul.f32.gmra.mxu0 %v229
    %v248 = vpop.f32.mrf.mxu0
    %v249 = vadd.f32 0.0, %v248
    %250 = vdwg.mxu0
    %251 = vmatpush.msra.mxu0 0.0
    %252 = vmatpush.msra.mxu0 0.0
    %253 = vmatpush.msra.mxu0 0.0
    %254 = vmatpush.msra.mxu0 0.0
    %255 = vmatpush.msra.mxu0 0.0
    %256 = vmatpush.msra.mxu0 0.0
    %257 = vmatpush.msra.mxu0 0.0
    %258 = vmatpush.msra.mxu0 0.0
    %259 = vmatpush.msra.mxu0 %v85
    %260 = vmatpush.msra.mxu0 %v83
    %261 = vmatpush.msra.mxu0 %v81
    %262 = vmatpush.msra.mxu0 %v79
    %263 = vmatpush.msra.mxu0 %v77
    %264 = vmatpush.msra.mxu0 %v75
    %265 = vmatpush.msra.mxu0 %v73
    %266 = vmatpush.msra.mxu0 %v71
    %267 = vmatmul.f32.gmra.mxu0 %v229
    %v268 = vpop.f32.mrf.mxu0
    %v269 = vadd.f32 0.0, %v268
    %270 = vdwg.mxu0
    %v271 = vadd.f32 %v163, %v249
    %v272 = vadd.f32 %v204, %v269
    %v273 = vxor.u32 %v271, 2147483648
    %v274 = vxor.u32 %v272, 2147483648
    %v275 = vmul.f32 %v273, 1.442695
    %v276 = vpow.pop %v275
    %v277 = vmul.f32 %v274, 1.442695
    %v278 = vpow.pop %v277
    %v279 = vadd.f32 %v276, 1.0
    %v280 = vadd.f32 %v278, 1.0
    %v281 = vrcp.pop %v279
    %v282 = vmul.f32 %v279, %v281
    %v283 = vsub.f32 1.0, %v282
    %v284 = vmul.f32 %v281, %v283
    %v285 = vadd.f32 %v281, %v284
    %vm286 = vweird.f32 %v279
    %vm287 = vweird.f32 %v281
    %vm288 = vmor %vm286, %vm287
    %v289 = vsel %vm288, %v281, %v285
    %v290 = vand.u32 2147483647, %v279
    %vm291 = vcmp.eq.f32.partialorder %v290, 8.507059e+37
    %v292 = vand.u32 %v279, 2147483648
    %v293 = vor.u32 1.1754944e-38, %v292
    %v294 = vsel %vm291, %v293, %v289
    %v295 = vmul.f32 1.0, %v294
    %v296 = vrcp.pop %v280
    %v297 = vmul.f32 %v280, %v296
    %v298 = vsub.f32 1.0, %v297
    %v299 = vmul.f32 %v296, %v298
    %v300 = vadd.f32 %v296, %v299
    %vm301 = vweird.f32 %v280
    %vm302 = vweird.f32 %v296
    %vm303 = vmor %vm301, %vm302
    %v304 = vsel %vm303, %v296, %v300
    %v305 = vand.u32 2147483647, %v280
    %vm306 = vcmp.eq.f32.partialorder %v305, 8.507059e+37
    %v307 = vand.u32 %v280, 2147483648
    %v308 = vor.u32 1.1754944e-38, %v307
    %v309 = vsel %vm306, %v308, %v304
    %v310 = vmul.f32 1.0, %v309
    %v311 = vtanh.pop %v272
    %v312 = vmul.f32 %v295, 0.0
    %v313 = vmul.f32 %v295, %v311
    %315 = vrot.lane.b32.xlu0 %v313, 64
    %v316 = vpop.permute.xlu0 %315
    %v318 = vadd.f32 %v312, %v316
    %v319 = vtanh.pop %v318
    %v320 = vmul.f32 %v310, %v319
    %322 = vrot.lane.b32.xlu0 %v320, 64
    %v323 = vpop.permute.xlu0 %322
    %325 = vst.msk [vmem:[#allocation2] sm:$0xff] %vm227, %v323
    %v326 = vsel %vm227, %v323, 0
    %328 = vmatpush.msra.mxu0 0.0
    %329 = vmatpush.msra.mxu0 0.0
    %330 = vmatpush.msra.mxu0 0.0
    %331 = vmatpush.msra.mxu0 0.0
    %332 = vmatpush.msra.mxu0 0.0
    %333 = vmatpush.msra.mxu0 0.0
    %334 = vmatpush.msra.mxu0 0.0
    %335 = vmatpush.msra.mxu0 0.0
    %336 = vmatpush.msra.mxu0 %v84
    %337 = vmatpush.msra.mxu0 %v82
    %338 = vmatpush.msra.mxu0 %v80
    %339 = vmatpush.msra.mxu0 %v78
    %340 = vmatpush.msra.mxu0 %v76
    %341 = vmatpush.msra.mxu0 %v74
    %342 = vmatpush.msra.mxu0 %v72
    %343 = vmatpush.msra.mxu0 %v70
    %344 = vmatmul.f32.gmra.mxu0 %v326
    %v345 = vpop.f32.mrf.mxu0
    %v346 = vadd.f32 0.0, %v345
    %347 = vdwg.mxu0
    %348 = vmatpush.msra.mxu0 0.0
    %349 = vmatpush.msra.mxu0 0.0
    %350 = vmatpush.msra.mxu0 0.0
    %351 = vmatpush.msra.mxu0 0.0
    %352 = vmatpush.msra.mxu0 0.0
    %353 = vmatpush.msra.mxu0 0.0
    %354 = vmatpush.msra.mxu0 0.0
    %355 = vmatpush.msra.mxu0 0.0
    %356 = vmatpush.msra.mxu0 %v85
    %357 = vmatpush.msra.mxu0 %v83
    %358 = vmatpush.msra.mxu0 %v81
    %359 = vmatpush.msra.mxu0 %v79
    %360 = vmatpush.msra.mxu0 %v77
    %361 = vmatpush.msra.mxu0 %v75
    %362 = vmatpush.msra.mxu0 %v73
    %363 = vmatpush.msra.mxu0 %v71
    %364 = vmatmul.f32.gmra.mxu0 %v326
    %v365 = vpop.f32.mrf.mxu0
    %v366 = vadd.f32 0.0, %v365
    %367 = vdwg.mxu0
    %v368 = vadd.f32 %v166, %v346
    %v369 = vadd.f32 %v207, %v366
    %v370 = vxor.u32 %v368, 2147483648
    %v371 = vxor.u32 %v369, 2147483648
    %v372 = vmul.f32 %v370, 1.442695
    %v373 = vpow.pop %v372
    %v374 = vmul.f32 %v371, 1.442695
    %v375 = vpow.pop %v374
    %v376 = vadd.f32 %v373, 1.0
    %v377 = vadd.f32 %v375, 1.0
    %v378 = vrcp.pop %v376
    %v379 = vmul.f32 %v376, %v378
    %v380 = vsub.f32 1.0, %v379
    %v381 = vmul.f32 %v378, %v380
    %v382 = vadd.f32 %v378, %v381
    %vm383 = vweird.f32 %v376
    %vm384 = vweird.f32 %v378
    %vm385 = vmor %vm383, %vm384
    %v386 = vsel %vm385, %v378, %v382
    %v387 = vand.u32 2147483647, %v376
    %vm388 = vcmp.eq.f32.partialorder %v387, 8.507059e+37
    %v389 = vand.u32 %v376, 2147483648
    %v390 = vor.u32 1.1754944e-38, %v389
    %v391 = vsel %vm388, %v390, %v386
    %v392 = vmul.f32 1.0, %v391
    %v393 = vrcp.pop %v377
    %v394 = vmul.f32 %v377, %v393
    %v395 = vsub.f32 1.0, %v394
    %v396 = vmul.f32 %v393, %v395
    %v397 = vadd.f32 %v393, %v396
    %vm398 = vweird.f32 %v377
    %vm399 = vweird.f32 %v393
    %vm400 = vmor %vm398, %vm399
    %v401 = vsel %vm400, %v393, %v397
    %v402 = vand.u32 2147483647, %v377
    %vm403 = vcmp.eq.f32.partialorder %v402, 8.507059e+37
    %v404 = vand.u32 %v377, 2147483648
    %v405 = vor.u32 1.1754944e-38, %v404
    %v406 = vsel %vm403, %v405, %v401
    %v407 = vmul.f32 1.0, %v406
    %v408 = vtanh.pop %v369
    %v409 = vmul.f32 %v392, %v318
    %v410 = vmul.f32 %v392, %v408
    %412 = vrot.lane.b32.xlu0 %v410, 64
    %v413 = vpop.permute.xlu0 %412
    %v415 = vadd.f32 %v409, %v413
    %v416 = vtanh.pop %v415
    %v417 = vmul.f32 %v407, %v416
    %419 = vrot.lane.b32.xlu0 %v417, 64
    %v420 = vpop.permute.xlu0 %419
    %422 = vst.msk [vmem:[#allocation2 + $0x8] sm:$0xff] %vm227, %v420
    %v423 = vsel %vm227, %v420, 0
    %425 = vmatpush.msra.mxu0 0.0
    %426 = vmatpush.msra.mxu0 0.0
    %427 = vmatpush.msra.mxu0 0.0
    %428 = vmatpush.msra.mxu0 0.0
    %429 = vmatpush.msra.mxu0 0.0
    %430 = vmatpush.msra.mxu0 0.0
    %431 = vmatpush.msra.mxu0 0.0
    %432 = vmatpush.msra.mxu0 0.0
    %433 = vmatpush.msra.mxu0 %v84
    %434 = vmatpush.msra.mxu0 %v82
    %435 = vmatpush.msra.mxu0 %v80
    %436 = vmatpush.msra.mxu0 %v78
    %437 = vmatpush.msra.mxu0 %v76
    %438 = vmatpush.msra.mxu0 %v74
    %439 = vmatpush.msra.mxu0 %v72
    %440 = vmatpush.msra.mxu0 %v70
    %441 = vmatmul.f32.gmra.mxu0 %v423
    %v442 = vpop.f32.mrf.mxu0
    %v443 = vadd.f32 0.0, %v442
    %444 = vdwg.mxu0
    %445 = vmatpush.msra.mxu0 0.0
    %446 = vmatpush.msra.mxu0 0.0
    %447 = vmatpush.msra.mxu0 0.0
    %448 = vmatpush.msra.mxu0 0.0
    %449 = vmatpush.msra.mxu0 0.0
    %450 = vmatpush.msra.mxu0 0.0
    %451 = vmatpush.msra.mxu0 0.0
    %452 = vmatpush.msra.mxu0 0.0
    %453 = vmatpush.msra.mxu0 %v85
    %454 = vmatpush.msra.mxu0 %v83
    %455 = vmatpush.msra.mxu0 %v81
    %456 = vmatpush.msra.mxu0 %v79
    %457 = vmatpush.msra.mxu0 %v77
    %458 = vmatpush.msra.mxu0 %v75
    %459 = vmatpush.msra.mxu0 %v73
    %460 = vmatpush.msra.mxu0 %v71
    %461 = vmatmul.f32.gmra.mxu0 %v423
    %v462 = vpop.f32.mrf.mxu0
    %v463 = vadd.f32 0.0, %v462
    %464 = vdwg.mxu0
    %v465 = vadd.f32 %v169, %v443
    %v466 = vadd.f32 %v210, %v463
    %v467 = vxor.u32 %v465, 2147483648
    %v468 = vxor.u32 %v466, 2147483648
    %v469 = vmul.f32 %v467, 1.442695
    %v470 = vpow.pop %v469
    %v471 = vmul.f32 %v468, 1.442695
    %v472 = vpow.pop %v471
    %v473 = vadd.f32 %v470, 1.0
    %v474 = vadd.f32 %v472, 1.0
    %v475 = vrcp.pop %v473
    %v476 = vmul.f32 %v473, %v475
    %v477 = vsub.f32 1.0, %v476
    %v478 = vmul.f32 %v475, %v477
    %v479 = vadd.f32 %v475, %v478
    %vm480 = vweird.f32 %v473
    %vm481 = vweird.f32 %v475
    %vm482 = vmor %vm480, %vm481
    %v483 = vsel %vm482, %v475, %v479
    %v484 = vand.u32 2147483647, %v473
    %vm485 = vcmp.eq.f32.partialorder %v484, 8.507059e+37
    %v486 = vand.u32 %v473, 2147483648
    %v487 = vor.u32 1.1754944e-38, %v486
    %v488 = vsel %vm485, %v487, %v483
    %v489 = vmul.f32 1.0, %v488
    %v490 = vrcp.pop %v474
    %v491 = vmul.f32 %v474, %v490
    %v492 = vsub.f32 1.0, %v491
    %v493 = vmul.f32 %v490, %v492
    %v494 = vadd.f32 %v490, %v493
    %vm495 = vweird.f32 %v474
    %vm496 = vweird.f32 %v490
    %vm497 = vmor %vm495, %vm496
    %v498 = vsel %vm497, %v490, %v494
    %v499 = vand.u32 2147483647, %v474
    %vm500 = vcmp.eq.f32.partialorder %v499, 8.507059e+37
    %v501 = vand.u32 %v474, 2147483648
    %v502 = vor.u32 1.1754944e-38, %v501
    %v503 = vsel %vm500, %v502, %v498
    %v504 = vmul.f32 1.0, %v503
    %v505 = vtanh.pop %v466
    %v506 = vmul.f32 %v489, %v415
    %v507 = vmul.f32 %v489, %v505
    %509 = vrot.lane.b32.xlu0 %v507, 64
    %v510 = vpop.permute.xlu0 %509
    %v512 = vadd.f32 %v506, %v510
    %v513 = vtanh.pop %v512
    %v514 = vmul.f32 %v504, %v513
    %516 = vrot.lane.b32.xlu0 %v514, 64
    %v517 = vpop.permute.xlu0 %516
    %519 = vst.msk [vmem:[#allocation2 + $0x10] sm:$0xff] %vm227, %v517
    %v520 = vsel %vm227, %v517, 0
    %522 = vmatpush.msra.mxu0 0.0
    %523 = vmatpush.msra.mxu0 0.0
    %524 = vmatpush.msra.mxu0 0.0
    %525 = vmatpush.msra.mxu0 0.0
    %526 = vmatpush.msra.mxu0 0.0
    %527 = vmatpush.msra.mxu0 0.0
    %528 = vmatpush.msra.mxu0 0.0
    %529 = vmatpush.msra.mxu0 0.0
    %530 = vmatpush.msra.mxu0 %v84
    %531 = vmatpush.msra.mxu0 %v82
    %532 = vmatpush.msra.mxu0 %v80
    %533 = vmatpush.msra.mxu0 %v78
    %534 = vmatpush.msra.mxu0 %v76
    %535 = vmatpush.msra.mxu0 %v74
    %536 = vmatpush.msra.mxu0 %v72
    %537 = vmatpush.msra.mxu0 %v70
    %538 = vmatmul.f32.gmra.mxu0 %v520
    %v539 = vpop.f32.mrf.mxu0
    %v540 = vadd.f32 0.0, %v539
    %541 = vdwg.mxu0
    %542 = vmatpush.msra.mxu0 0.0
    %543 = vmatpush.msra.mxu0 0.0
    %544 = vmatpush.msra.mxu0 0.0
    %545 = vmatpush.msra.mxu0 0.0
    %546 = vmatpush.msra.mxu0 0.0
    %547 = vmatpush.msra.mxu0 0.0
    %548 = vmatpush.msra.mxu0 0.0
    %549 = vmatpush.msra.mxu0 0.0
    %550 = vmatpush.msra.mxu0 %v85
    %551 = vmatpush.msra.mxu0 %v83
    %552 = vmatpush.msra.mxu0 %v81
    %553 = vmatpush.msra.mxu0 %v79
    %554 = vmatpush.msra.mxu0 %v77
    %555 = vmatpush.msra.mxu0 %v75
    %556 = vmatpush.msra.mxu0 %v73
    %557 = vmatpush.msra.mxu0 %v71
    %558 = vmatmul.f32.gmra.mxu0 %v520
    %v559 = vpop.f32.mrf.mxu0
    %v560 = vadd.f32 0.0, %v559
    %561 = vdwg.mxu0
    %v562 = vadd.f32 %v172, %v540
    %v563 = vadd.f32 %v213, %v560
    %v564 = vxor.u32 %v562, 2147483648
    %v565 = vxor.u32 %v563, 2147483648
    %v566 = vmul.f32 %v564, 1.442695
    %v567 = vpow.pop %v566
    %v568 = vmul.f32 %v565, 1.442695
    %v569 = vpow.pop %v568
    %v570 = vadd.f32 %v567, 1.0
    %v571 = vadd.f32 %v569, 1.0
    %v572 = vrcp.pop %v570
    %v573 = vmul.f32 %v570, %v572
    %v574 = vsub.f32 1.0, %v573
    %v575 = vmul.f32 %v572, %v574
    %v576 = vadd.f32 %v572, %v575
    %vm577 = vweird.f32 %v570
    %vm578 = vweird.f32 %v572
    %vm579 = vmor %vm577, %vm578
    %v580 = vsel %vm579, %v572, %v576
    %v581 = vand.u32 2147483647, %v570
    %vm582 = vcmp.eq.f32.partialorder %v581, 8.507059e+37
    %v583 = vand.u32 %v570, 2147483648
    %v584 = vor.u32 1.1754944e-38, %v583
    %v585 = vsel %vm582, %v584, %v580
    %v586 = vmul.f32 1.0, %v585
    %v587 = vrcp.pop %v571
    %v588 = vmul.f32 %v571, %v587
    %v589 = vsub.f32 1.0, %v588
    %v590 = vmul.f32 %v587, %v589
    %v591 = vadd.f32 %v587, %v590
    %vm592 = vweird.f32 %v571
    %vm593 = vweird.f32 %v587
    %vm594 = vmor %vm592, %vm593
    %v595 = vsel %vm594, %v587, %v591
    %v596 = vand.u32 2147483647, %v571
    %vm597 = vcmp.eq.f32.partialorder %v596, 8.507059e+37
    %v598 = vand.u32 %v571, 2147483648
    %v599 = vor.u32 1.1754944e-38, %v598
    %v600 = vsel %vm597, %v599, %v595
    %v601 = vmul.f32 1.0, %v600
    %v602 = vtanh.pop %v563
    %v603 = vmul.f32 %v586, %v512
    %v604 = vmul.f32 %v586, %v602
    %606 = vrot.lane.b32.xlu0 %v604, 64
    %v607 = vpop.permute.xlu0 %606
    %v609 = vadd.f32 %v603, %v607
    %v610 = vtanh.pop %v609
    %v611 = vmul.f32 %v601, %v610
    %613 = vrot.lane.b32.xlu0 %v611, 64
    %v614 = vpop.permute.xlu0 %613
    %616 = vst.msk [vmem:[#allocation2 + $0x18] sm:$0xff] %vm227, %v614
    %v617 = vsel %vm227, %v614, 0
    %619 = vmatpush.msra.mxu0 0.0
    %620 = vmatpush.msra.mxu0 0.0
    %621 = vmatpush.msra.mxu0 0.0
    %622 = vmatpush.msra.mxu0 0.0
    %623 = vmatpush.msra.mxu0 0.0
    %624 = vmatpush.msra.mxu0 0.0
    %625 = vmatpush.msra.mxu0 0.0
    %626 = vmatpush.msra.mxu0 0.0
    %627 = vmatpush.msra.mxu0 %v84
    %628 = vmatpush.msra.mxu0 %v82
    %629 = vmatpush.msra.mxu0 %v80
    %630 = vmatpush.msra.mxu0 %v78
    %631 = vmatpush.msra.mxu0 %v76
    %632 = vmatpush.msra.mxu0 %v74
    %633 = vmatpush.msra.mxu0 %v72
    %634 = vmatpush.msra.mxu0 %v70
    %635 = vmatmul.f32.gmra.mxu0 %v617
    %v636 = vpop.f32.mrf.mxu0
    %v637 = vadd.f32 0.0, %v636
    %638 = vdwg.mxu0
    %639 = vmatpush.msra.mxu0 0.0
    %640 = vmatpush.msra.mxu0 0.0
    %641 = vmatpush.msra.mxu0 0.0
    %642 = vmatpush.msra.mxu0 0.0
    %643 = vmatpush.msra.mxu0 0.0
    %644 = vmatpush.msra.mxu0 0.0
    %645 = vmatpush.msra.mxu0 0.0
    %646 = vmatpush.msra.mxu0 0.0
    %647 = vmatpush.msra.mxu0 %v85
    %648 = vmatpush.msra.mxu0 %v83
    %649 = vmatpush.msra.mxu0 %v81
    %650 = vmatpush.msra.mxu0 %v79
    %651 = vmatpush.msra.mxu0 %v77
    %652 = vmatpush.msra.mxu0 %v75
    %653 = vmatpush.msra.mxu0 %v73
    %654 = vmatpush.msra.mxu0 %v71
    %655 = vmatmul.f32.gmra.mxu0 %v617
    %v656 = vpop.f32.mrf.mxu0
    %v657 = vadd.f32 0.0, %v656
    %658 = vdwg.mxu0
    %v659 = vadd.f32 %v175, %v637
    %v660 = vadd.f32 %v216, %v657
    %v661 = vxor.u32 %v659, 2147483648
    %v662 = vxor.u32 %v660, 2147483648
    %v663 = vmul.f32 %v661, 1.442695
    %v664 = vpow.pop %v663
    %v665 = vmul.f32 %v662, 1.442695
    %v666 = vpow.pop %v665
    %v667 = vadd.f32 %v664, 1.0
    %v668 = vadd.f32 %v666, 1.0
    %v669 = vrcp.pop %v667
    %v670 = vmul.f32 %v667, %v669
    %v671 = vsub.f32 1.0, %v670
    %v672 = vmul.f32 %v669, %v671
    %v673 = vadd.f32 %v669, %v672
    %vm674 = vweird.f32 %v667
    %vm675 = vweird.f32 %v669
    %vm676 = vmor %vm674, %vm675
    %v677 = vsel %vm676, %v669, %v673
    %v678 = vand.u32 2147483647, %v667
    %vm679 = vcmp.eq.f32.partialorder %v678, 8.507059e+37
    %v680 = vand.u32 %v667, 2147483648
    %v681 = vor.u32 1.1754944e-38, %v680
    %v682 = vsel %vm679, %v681, %v677
    %v683 = vmul.f32 1.0, %v682
    %v684 = vrcp.pop %v668
    %v685 = vmul.f32 %v668, %v684
    %v686 = vsub.f32 1.0, %v685
    %v687 = vmul.f32 %v684, %v686
    %v688 = vadd.f32 %v684, %v687
    %vm689 = vweird.f32 %v668
    %vm690 = vweird.f32 %v684
    %vm691 = vmor %vm689, %vm690
    %v692 = vsel %vm691, %v684, %v688
    %v693 = vand.u32 2147483647, %v668
    %vm694 = vcmp.eq.f32.partialorder %v693, 8.507059e+37
    %v695 = vand.u32 %v668, 2147483648
    %v696 = vor.u32 1.1754944e-38, %v695
    %v697 = vsel %vm694, %v696, %v692
    %v698 = vmul.f32 1.0, %v697
    %v699 = vtanh.pop %v660
    %v700 = vmul.f32 %v683, %v609
    %v701 = vmul.f32 %v683, %v699
    %703 = vrot.lane.b32.xlu0 %v701, 64
    %v704 = vpop.permute.xlu0 %703
    %v706 = vadd.f32 %v700, %v704
    %v707 = vtanh.pop %v706
    %v708 = vmul.f32 %v698, %v707
    %710 = vrot.lane.b32.xlu0 %v708, 64
    %v711 = vpop.permute.xlu0 %710
    %713 = vst.msk [vmem:[#allocation2 + $0x20] sm:$0xff] %vm227, %v711
    %v714 = vsel %vm227, %v711, 0
    %716 = vmatpush.msra.mxu0 0.0
    %717 = vmatpush.msra.mxu0 0.0
    %718 = vmatpush.msra.mxu0 0.0
    %719 = vmatpush.msra.mxu0 0.0
    %720 = vmatpush.msra.mxu0 0.0
    %721 = vmatpush.msra.mxu0 0.0
    %722 = vmatpush.msra.mxu0 0.0
    %723 = vmatpush.msra.mxu0 0.0
    %724 = vmatpush.msra.mxu0 %v84
    %725 = vmatpush.msra.mxu0 %v82
    %726 = vmatpush.msra.mxu0 %v80
    %727 = vmatpush.msra.mxu0 %v78
    %728 = vmatpush.msra.mxu0 %v76
    %729 = vmatpush.msra.mxu0 %v74
    %730 = vmatpush.msra.mxu0 %v72
    %731 = vmatpush.msra.mxu0 %v70
    %732 = vmatmul.f32.gmra.mxu0 %v714
    %v733 = vpop.f32.mrf.mxu0
    %v734 = vadd.f32 0.0, %v733
    %735 = vdwg.mxu0
    %736 = vmatpush.msra.mxu0 0.0
    %737 = vmatpush.msra.mxu0 0.0
    %738 = vmatpush.msra.mxu0 0.0
    %739 = vmatpush.msra.mxu0 0.0
    %740 = vmatpush.msra.mxu0 0.0
    %741 = vmatpush.msra.mxu0 0.0
    %742 = vmatpush.msra.mxu0 0.0
    %743 = vmatpush.msra.mxu0 0.0
    %744 = vmatpush.msra.mxu0 %v85
    %745 = vmatpush.msra.mxu0 %v83
    %746 = vmatpush.msra.mxu0 %v81
    %747 = vmatpush.msra.mxu0 %v79
    %748 = vmatpush.msra.mxu0 %v77
    %749 = vmatpush.msra.mxu0 %v75
    %750 = vmatpush.msra.mxu0 %v73
    %751 = vmatpush.msra.mxu0 %v71
    %752 = vmatmul.f32.gmra.mxu0 %v714
    %v753 = vpop.f32.mrf.mxu0
    %v754 = vadd.f32 0.0, %v753
    %755 = vdwg.mxu0
    %v756 = vadd.f32 %v178, %v734
    %v757 = vadd.f32 %v219, %v754
    %v758 = vxor.u32 %v756, 2147483648
    %v759 = vxor.u32 %v757, 2147483648
    %v760 = vmul.f32 %v758, 1.442695
    %v761 = vpow.pop %v760
    %v762 = vmul.f32 %v759, 1.442695
    %v763 = vpow.pop %v762
    %v764 = vadd.f32 %v761, 1.0
    %v765 = vadd.f32 %v763, 1.0
    %v766 = vrcp.pop %v764
    %v767 = vmul.f32 %v764, %v766
    %v768 = vsub.f32 1.0, %v767
    %v769 = vmul.f32 %v766, %v768
    %v770 = vadd.f32 %v766, %v769
    %vm771 = vweird.f32 %v764
    %vm772 = vweird.f32 %v766
    %vm773 = vmor %vm771, %vm772
    %v774 = vsel %vm773, %v766, %v770
    %v775 = vand.u32 2147483647, %v764
    %vm776 = vcmp.eq.f32.partialorder %v775, 8.507059e+37
    %v777 = vand.u32 %v764, 2147483648
    %v778 = vor.u32 1.1754944e-38, %v777
    %v779 = vsel %vm776, %v778, %v774
    %v780 = vmul.f32 1.0, %v779
    %v781 = vrcp.pop %v765
    %v782 = vmul.f32 %v765, %v781
    %v783 = vsub.f32 1.0, %v782
    %v784 = vmul.f32 %v781, %v783
    %v785 = vadd.f32 %v781, %v784
    %vm786 = vweird.f32 %v765
    %vm787 = vweird.f32 %v781
    %vm788 = vmor %vm786, %vm787
    %v789 = vsel %vm788, %v781, %v785
    %v790 = vand.u32 2147483647, %v765
    %vm791 = vcmp.eq.f32.partialorder %v790, 8.507059e+37
    %v792 = vand.u32 %v765, 2147483648
    %v793 = vor.u32 1.1754944e-38, %v792
    %v794 = vsel %vm791, %v793, %v789
    %v795 = vmul.f32 1.0, %v794
    %v796 = vtanh.pop %v757
    %v797 = vmul.f32 %v780, %v706
    %v798 = vmul.f32 %v780, %v796
    %800 = vrot.lane.b32.xlu0 %v798, 64
    %v801 = vpop.permute.xlu0 %800
    %v803 = vadd.f32 %v797, %v801
    %v804 = vtanh.pop %v803
    %v805 = vmul.f32 %v795, %v804
    %807 = vrot.lane.b32.xlu0 %v805, 64
    %v808 = vpop.permute.xlu0 %807
    %810 = vst.msk [vmem:[#allocation2 + $0x28] sm:$0xff] %vm227, %v808
    %v811 = vsel %vm227, %v808, 0
    %813 = vmatpush.msra.mxu0 0.0
    %814 = vmatpush.msra.mxu0 0.0
    %815 = vmatpush.msra.mxu0 0.0
    %816 = vmatpush.msra.mxu0 0.0
    %817 = vmatpush.msra.mxu0 0.0
    %818 = vmatpush.msra.mxu0 0.0
    %819 = vmatpush.msra.mxu0 0.0
    %820 = vmatpush.msra.mxu0 0.0
    %821 = vmatpush.msra.mxu0 %v84
    %822 = vmatpush.msra.mxu0 %v82
    %823 = vmatpush.msra.mxu0 %v80
    %824 = vmatpush.msra.mxu0 %v78
    %825 = vmatpush.msra.mxu0 %v76
    %826 = vmatpush.msra.mxu0 %v74
    %827 = vmatpush.msra.mxu0 %v72
    %828 = vmatpush.msra.mxu0 %v70
    %829 = vmatmul.f32.gmra.mxu0 %v811
    %v830 = vpop.f32.mrf.mxu0
    %v831 = vadd.f32 0.0, %v830
    %832 = vdwg.mxu0
    %833 = vmatpush.msra.mxu0 0.0
    %834 = vmatpush.msra.mxu0 0.0
    %835 = vmatpush.msra.mxu0 0.0
    %836 = vmatpush.msra.mxu0 0.0
    %837 = vmatpush.msra.mxu0 0.0
    %838 = vmatpush.msra.mxu0 0.0
    %839 = vmatpush.msra.mxu0 0.0
    %840 = vmatpush.msra.mxu0 0.0
    %841 = vmatpush.msra.mxu0 %v85
    %842 = vmatpush.msra.mxu0 %v83
    %843 = vmatpush.msra.mxu0 %v81
    %844 = vmatpush.msra.mxu0 %v79
    %845 = vmatpush.msra.mxu0 %v77
    %846 = vmatpush.msra.mxu0 %v75
    %847 = vmatpush.msra.mxu0 %v73
    %848 = vmatpush.msra.mxu0 %v71
    %849 = vmatmul.f32.gmra.mxu0 %v811
    %v850 = vpop.f32.mrf.mxu0
    %v851 = vadd.f32 0.0, %v850
    %852 = vdwg.mxu0
    %v853 = vadd.f32 %v181, %v831
    %v854 = vadd.f32 %v222, %v851
    %v855 = vxor.u32 %v853, 2147483648
    %v856 = vxor.u32 %v854, 2147483648
    %v857 = vmul.f32 %v855, 1.442695
    %v858 = vpow.pop %v857
    %v859 = vmul.f32 %v856, 1.442695
    %v860 = vpow.pop %v859
    %v861 = vadd.f32 %v858, 1.0
    %v862 = vadd.f32 %v860, 1.0
    %v863 = vrcp.pop %v861
    %v864 = vmul.f32 %v861, %v863
    %v865 = vsub.f32 1.0, %v864
    %v866 = vmul.f32 %v863, %v865
    %v867 = vadd.f32 %v863, %v866
    %vm868 = vweird.f32 %v861
    %vm869 = vweird.f32 %v863
    %vm870 = vmor %vm868, %vm869
    %v871 = vsel %vm870, %v863, %v867
    %v872 = vand.u32 2147483647, %v861
    %vm873 = vcmp.eq.f32.partialorder %v872, 8.507059e+37
    %v874 = vand.u32 %v861, 2147483648
    %v875 = vor.u32 1.1754944e-38, %v874
    %v876 = vsel %vm873, %v875, %v871
    %v877 = vmul.f32 1.0, %v876
    %v878 = vrcp.pop %v862
    %v879 = vmul.f32 %v862, %v878
    %v880 = vsub.f32 1.0, %v879
    %v881 = vmul.f32 %v878, %v880
    %v882 = vadd.f32 %v878, %v881
    %vm883 = vweird.f32 %v862
    %vm884 = vweird.f32 %v878
    %vm885 = vmor %vm883, %vm884
    %v886 = vsel %vm885, %v878, %v882
    %v887 = vand.u32 2147483647, %v862
    %vm888 = vcmp.eq.f32.partialorder %v887, 8.507059e+37
    %v889 = vand.u32 %v862, 2147483648
    %v890 = vor.u32 1.1754944e-38, %v889
    %v891 = vsel %vm888, %v890, %v886
    %v892 = vmul.f32 1.0, %v891
    %v893 = vtanh.pop %v854
    %v894 = vmul.f32 %v877, %v803
    %v895 = vmul.f32 %v877, %v893
    %897 = vrot.lane.b32.xlu0 %v895, 64
    %v898 = vpop.permute.xlu0 %897
    %v900 = vadd.f32 %v894, %v898
    %v901 = vtanh.pop %v900
    %v902 = vmul.f32 %v892, %v901
    %904 = vrot.lane.b32.xlu0 %v902, 64
    %v905 = vpop.permute.xlu0 %904
    %907 = vst.msk [vmem:[#allocation2 + $0x30] sm:$0xff] %vm227, %v905
    %v908 = vsel %vm227, %v905, 0
    %910 = vmatpush.msra.mxu0 0.0
    %911 = vmatpush.msra.mxu0 0.0
    %912 = vmatpush.msra.mxu0 0.0
    %913 = vmatpush.msra.mxu0 0.0
    %914 = vmatpush.msra.mxu0 0.0
    %915 = vmatpush.msra.mxu0 0.0
    %916 = vmatpush.msra.mxu0 0.0
    %917 = vmatpush.msra.mxu0 0.0
    %918 = vmatpush.msra.mxu0 %v84
    %919 = vmatpush.msra.mxu0 %v82
    %920 = vmatpush.msra.mxu0 %v80
    %921 = vmatpush.msra.mxu0 %v78
    %922 = vmatpush.msra.mxu0 %v76
    %923 = vmatpush.msra.mxu0 %v74
    %924 = vmatpush.msra.mxu0 %v72
    %925 = vmatpush.msra.mxu0 %v70
    %926 = vmatmul.f32.gmra.mxu0 %v908
    %v927 = vpop.f32.mrf.mxu0
    %v928 = vadd.f32 0.0, %v927
    %929 = vdwg.mxu0
    %930 = vmatpush.msra.mxu0 0.0
    %931 = vmatpush.msra.mxu0 0.0
    %932 = vmatpush.msra.mxu0 0.0
    %933 = vmatpush.msra.mxu0 0.0
    %934 = vmatpush.msra.mxu0 0.0
    %935 = vmatpush.msra.mxu0 0.0
    %936 = vmatpush.msra.mxu0 0.0
    %937 = vmatpush.msra.mxu0 0.0
    %938 = vmatpush.msra.mxu0 %v85
    %939 = vmatpush.msra.mxu0 %v83
    %940 = vmatpush.msra.mxu0 %v81
    %941 = vmatpush.msra.mxu0 %v79
    %942 = vmatpush.msra.mxu0 %v77
    %943 = vmatpush.msra.mxu0 %v75
    %944 = vmatpush.msra.mxu0 %v73
    %945 = vmatpush.msra.mxu0 %v71
    %946 = vmatmul.f32.gmra.mxu0 %v908
    %v947 = vpop.f32.mrf.mxu0
    %v948 = vadd.f32 0.0, %v947
    %949 = vdwg.mxu0
    %v950 = vadd.f32 %v184, %v928
    %v951 = vadd.f32 %v225, %v948
    %v952 = vxor.u32 %v950, 2147483648
    %v953 = vxor.u32 %v951, 2147483648
    %v954 = vmul.f32 %v952, 1.442695
    %v955 = vpow.pop %v954
    %v956 = vmul.f32 %v953, 1.442695
    %v957 = vpow.pop %v956
    %v958 = vadd.f32 %v955, 1.0
    %v959 = vadd.f32 %v957, 1.0
    %v960 = vrcp.pop %v958
    %v961 = vmul.f32 %v958, %v960
    %v962 = vsub.f32 1.0, %v961
    %v963 = vmul.f32 %v960, %v962
    %v964 = vadd.f32 %v960, %v963
    %vm965 = vweird.f32 %v958
    %vm966 = vweird.f32 %v960
    %vm967 = vmor %vm965, %vm966
    %v968 = vsel %vm967, %v960, %v964
    %v969 = vand.u32 2147483647, %v958
    %vm970 = vcmp.eq.f32.partialorder %v969, 8.507059e+37
    %v971 = vand.u32 %v958, 2147483648
    %v972 = vor.u32 1.1754944e-38, %v971
    %v973 = vsel %vm970, %v972, %v968
    %v974 = vmul.f32 1.0, %v973
    %v975 = vrcp.pop %v959
    %v976 = vmul.f32 %v959, %v975
    %v977 = vsub.f32 1.0, %v976
    %v978 = vmul.f32 %v975, %v977
    %v979 = vadd.f32 %v975, %v978
    %vm980 = vweird.f32 %v959
    %vm981 = vweird.f32 %v975
    %vm982 = vmor %vm980, %vm981
    %v983 = vsel %vm982, %v975, %v979
    %v984 = vand.u32 2147483647, %v959
    %vm985 = vcmp.eq.f32.partialorder %v984, 8.507059e+37
    %v986 = vand.u32 %v959, 2147483648
    %v987 = vor.u32 1.1754944e-38, %v986
    %v988 = vsel %vm985, %v987, %v983
    %v989 = vmul.f32 1.0, %v988
    %v990 = vtanh.pop %v951
    %v991 = vmul.f32 %v974, %v900
    %v992 = vmul.f32 %v974, %v990
    %994 = vrot.lane.b32.xlu0 %v992, 64
    %v995 = vpop.permute.xlu0 %994
    %v997 = vadd.f32 %v991, %v995
    %v998 = vtanh.pop %v997
    %v999 = vmul.f32 %v989, %v998
    %1001 = vrot.lane.b32.xlu0 %v999, 64
    %v1002 = vpop.permute.xlu0 %1001
    %1004 = vst.msk [vmem:[#allocation2 + $0x38] sm:$0xff] %vm227, %v1002
    %v1005 = vld [vmem:[#allocation2] sm:$0xff]
    %v1006 = vld [vmem:[#allocation2 + $0x8] sm:$0xff]
    %v1007 = vld [vmem:[#allocation2 + $0x10] sm:$0xff]
    %v1008 = vld [vmem:[#allocation2 + $0x18] sm:$0xff]
    %v1009 = vld [vmem:[#allocation2 + $0x20] sm:$0xff]
    %v1010 = vld [vmem:[#allocation2 + $0x28] sm:$0xff]
    %v1011 = vld [vmem:[#allocation2 + $0x30] sm:$0xff]
    %v1012 = vld [vmem:[#allocation2 + $0x38] sm:$0xff]
    %v1013 = vld [vmem:[#allocation3] sm:$0xff]
    %v1014 = vld [vmem:[#allocation3 + $0x8] sm:$0xff]
    %v1015 = vld [vmem:[#allocation3 + $0x10] sm:$0xff]
    %v1016 = vld [vmem:[#allocation3 + $0x18] sm:$0xff]
    %v1017 = vld [vmem:[#allocation3 + $0x20] sm:$0xff]
    %v1018 = vld [vmem:[#allocation3 + $0x28] sm:$0xff]
    %v1019 = vld [vmem:[#allocation3 + $0x30] sm:$0xff]
    %v1020 = vld [vmem:[#allocation3 + $0x38] sm:$0xff]
    %v1021 = vld [vmem:[#allocation3 + $0x40] sm:$0xff]
    %v1022 = vld [vmem:[#allocation3 + $0x48] sm:$0xff]
    %v1023 = vld [vmem:[#allocation3 + $0x50] sm:$0xff]
    %v1024 = vld [vmem:[#allocation3 + $0x58] sm:$0xff]
    %v1025 = vld [vmem:[#allocation3 + $0x60] sm:$0xff]
    %v1026 = vld [vmem:[#allocation3 + $0x68] sm:$0xff]
    %v1027 = vld [vmem:[#allocation3 + $0x70] sm:$0xff]
    %v1028 = vld [vmem:[#allocation3 + $0x78] sm:$0xff]
    %v1029 = vld [vmem:[%s6] sm:$0x3]
    %v1031 = vperm.slane %v1029, 0
    %v1032 = vperm.slane %v1029, 1
    %v1036 = vsel %vm227, %v1005, 0
    %v1039 = vsel %vm227, %v1006, 0
    %v1042 = vsel %vm227, %v1007, 0
    %v1045 = vsel %vm227, %v1008, 0
    %v1048 = vsel %vm227, %v1009, 0
    %v1051 = vsel %vm227, %v1010, 0
    %v1054 = vsel %vm227, %v1011, 0
    %v1057 = vsel %vm227, %v1012, 0
    %1059 = vmatpush.msra.mxu0 0.0
    %1060 = vmatpush.msra.mxu0 0.0
    %1061 = vmatpush.msra.mxu0 0.0
    %1062 = vmatpush.msra.mxu0 0.0
    %1063 = vmatpush.msra.mxu0 0.0
    %1064 = vmatpush.msra.mxu0 0.0
    %1065 = vmatpush.msra.mxu0 0.0
    %1066 = vmatpush.msra.mxu0 0.0
    %1067 = vmatpush.msra.mxu0 %v1027
    %1068 = vmatpush.msra.mxu0 %v1025
    %1069 = vmatpush.msra.mxu0 %v1023
    %1070 = vmatpush.msra.mxu0 %v1021
    %1071 = vmatpush.msra.mxu0 %v1019
    %1072 = vmatpush.msra.mxu0 %v1017
    %1073 = vmatpush.msra.mxu0 %v1015
    %1074 = vmatpush.msra.mxu0 %v1013
    %1075 = vmatmul.f32.gmra.mxu0 %v1036
    %v1076 = vpop.f32.mrf.mxu0
    %v1077 = vadd.f32 %v1031, %v1076
    %1078 = vmatmul.f32.gmra.mxu0 %v1039
    %v1079 = vpop.f32.mrf.mxu0
    %v1080 = vadd.f32 %v1031, %v1079
    %1081 = vmatmul.f32.gmra.mxu0 %v1042
    %v1082 = vpop.f32.mrf.mxu0
    %v1083 = vadd.f32 %v1031, %v1082
    %1084 = vmatmul.f32.gmra.mxu0 %v1045
    %v1085 = vpop.f32.mrf.mxu0
    %v1086 = vadd.f32 %v1031, %v1085
    %1087 = vmatmul.f32.gmra.mxu0 %v1048
    %v1088 = vpop.f32.mrf.mxu0
    %v1089 = vadd.f32 %v1031, %v1088
    %1090 = vmatmul.f32.gmra.mxu0 %v1051
    %v1091 = vpop.f32.mrf.mxu0
    %v1092 = vadd.f32 %v1031, %v1091
    %1093 = vmatmul.f32.gmra.mxu0 %v1054
    %v1094 = vpop.f32.mrf.mxu0
    %v1095 = vadd.f32 %v1031, %v1094
    %1096 = vmatmul.f32.gmra.mxu0 %v1057
    %v1097 = vpop.f32.mrf.mxu0
    %v1098 = vadd.f32 %v1031, %v1097
    %1099 = vdwg.mxu0
    %1100 = vmatpush.msra.mxu0 0.0
    %1101 = vmatpush.msra.mxu0 0.0
    %1102 = vmatpush.msra.mxu0 0.0
    %1103 = vmatpush.msra.mxu0 0.0
    %1104 = vmatpush.msra.mxu0 0.0
    %1105 = vmatpush.msra.mxu0 0.0
    %1106 = vmatpush.msra.mxu0 0.0
    %1107 = vmatpush.msra.mxu0 0.0
    %1108 = vmatpush.msra.mxu0 %v1028
    %1109 = vmatpush.msra.mxu0 %v1026
    %1110 = vmatpush.msra.mxu0 %v1024
    %1111 = vmatpush.msra.mxu0 %v1022
    %1112 = vmatpush.msra.mxu0 %v1020
    %1113 = vmatpush.msra.mxu0 %v1018
    %1114 = vmatpush.msra.mxu0 %v1016
    %1115 = vmatpush.msra.mxu0 %v1014
    %1116 = vmatmul.f32.gmra.mxu0 %v1036
    %v1117 = vpop.f32.mrf.mxu0
    %v1118 = vadd.f32 %v1032, %v1117
    %1119 = vmatmul.f32.gmra.mxu0 %v1039
    %v1120 = vpop.f32.mrf.mxu0
    %v1121 = vadd.f32 %v1032, %v1120
    %1122 = vmatmul.f32.gmra.mxu0 %v1042
    %v1123 = vpop.f32.mrf.mxu0
    %v1124 = vadd.f32 %v1032, %v1123
    %1125 = vmatmul.f32.gmra.mxu0 %v1045
    %v1126 = vpop.f32.mrf.mxu0
    %v1127 = vadd.f32 %v1032, %v1126
    %1128 = vmatmul.f32.gmra.mxu0 %v1048
    %v1129 = vpop.f32.mrf.mxu0
    %v1130 = vadd.f32 %v1032, %v1129
    %1131 = vmatmul.f32.gmra.mxu0 %v1051
    %v1132 = vpop.f32.mrf.mxu0
    %v1133 = vadd.f32 %v1032, %v1132
    %1134 = vmatmul.f32.gmra.mxu0 %v1054
    %v1135 = vpop.f32.mrf.mxu0
    %v1136 = vadd.f32 %v1032, %v1135
    %1137 = vmatmul.f32.gmra.mxu0 %v1057
    %v1138 = vpop.f32.mrf.mxu0
    %v1139 = vadd.f32 %v1032, %v1138
    %1140 = vdwg.mxu0
    %1141 = vmatpush.msra.mxu0 0.0
    %1142 = vmatpush.msra.mxu0 0.0
    %1143 = vmatpush.msra.mxu0 0.0
    %1144 = vmatpush.msra.mxu0 0.0
    %1145 = vmatpush.msra.mxu0 0.0
    %1146 = vmatpush.msra.mxu0 0.0
    %1147 = vmatpush.msra.mxu0 0.0
    %1148 = vmatpush.msra.mxu0 0.0
    %1149 = vmatpush.msra.mxu0 %v100
    %1150 = vmatpush.msra.mxu0 %v98
    %1151 = vmatpush.msra.mxu0 %v96
    %1152 = vmatpush.msra.mxu0 %v94
    %1153 = vmatpush.msra.mxu0 %v92
    %1154 = vmatpush.msra.mxu0 %v90
    %1155 = vmatpush.msra.mxu0 %v88
    %1156 = vmatpush.msra.mxu0 %v86
    %1157 = vmatmul.f32.gmra.mxu0 %v229
    %v1158 = vpop.f32.mrf.mxu0
    %v1159 = vadd.f32 0.0, %v1158
    %1160 = vdwg.mxu0
    %1161 = vmatpush.msra.mxu0 0.0
    %1162 = vmatpush.msra.mxu0 0.0
    %1163 = vmatpush.msra.mxu0 0.0
    %1164 = vmatpush.msra.mxu0 0.0
    %1165 = vmatpush.msra.mxu0 0.0
    %1166 = vmatpush.msra.mxu0 0.0
    %1167 = vmatpush.msra.mxu0 0.0
    %1168 = vmatpush.msra.mxu0 0.0
    %1169 = vmatpush.msra.mxu0 %v101
    %1170 = vmatpush.msra.mxu0 %v99
    %1171 = vmatpush.msra.mxu0 %v97
    %1172 = vmatpush.msra.mxu0 %v95
    %1173 = vmatpush.msra.mxu0 %v93
    %1174 = vmatpush.msra.mxu0 %v91
    %1175 = vmatpush.msra.mxu0 %v89
    %1176 = vmatpush.msra.mxu0 %v87
    %1177 = vmatmul.f32.gmra.mxu0 %v229
    %v1178 = vpop.f32.mrf.mxu0
    %v1179 = vadd.f32 0.0, %v1178
    %1180 = vdwg.mxu0
    %v1181 = vadd.f32 %v1077, %v1159
    %v1182 = vadd.f32 %v1118, %v1179
    %v1183 = vxor.u32 %v1181, 2147483648
    %v1184 = vxor.u32 %v1182, 2147483648
    %v1185 = vmul.f32 %v1183, 1.442695
    %v1186 = vpow.pop %v1185
    %v1187 = vmul.f32 %v1184, 1.442695
    %v1188 = vpow.pop %v1187
    %v1189 = vadd.f32 %v1186, 1.0
    %v1190 = vadd.f32 %v1188, 1.0
    %v1191 = vrcp.pop %v1189
    %v1192 = vmul.f32 %v1189, %v1191
    %v1193 = vsub.f32 1.0, %v1192
    %v1194 = vmul.f32 %v1191, %v1193
    %v1195 = vadd.f32 %v1191, %v1194
    %vm1196 = vweird.f32 %v1189
    %vm1197 = vweird.f32 %v1191
    %vm1198 = vmor %vm1196, %vm1197
    %v1199 = vsel %vm1198, %v1191, %v1195
    %v1200 = vand.u32 2147483647, %v1189
    %vm1201 = vcmp.eq.f32.partialorder %v1200, 8.507059e+37
    %v1202 = vand.u32 %v1189, 2147483648
    %v1203 = vor.u32 1.1754944e-38, %v1202
    %v1204 = vsel %vm1201, %v1203, %v1199
    %v1205 = vmul.f32 1.0, %v1204
    %v1206 = vrcp.pop %v1190
    %v1207 = vmul.f32 %v1190, %v1206
    %v1208 = vsub.f32 1.0, %v1207
    %v1209 = vmul.f32 %v1206, %v1208
    %v1210 = vadd.f32 %v1206, %v1209
    %vm1211 = vweird.f32 %v1190
    %vm1212 = vweird.f32 %v1206
    %vm1213 = vmor %vm1211, %vm1212
    %v1214 = vsel %vm1213, %v1206, %v1210
    %v1215 = vand.u32 2147483647, %v1190
    %vm1216 = vcmp.eq.f32.partialorder %v1215, 8.507059e+37
    %v1217 = vand.u32 %v1190, 2147483648
    %v1218 = vor.u32 1.1754944e-38, %v1217
    %v1219 = vsel %vm1216, %v1218, %v1214
    %v1220 = vmul.f32 1.0, %v1219
    %v1221 = vtanh.pop %v1182
    %v1222 = vmul.f32 %v1205, 0.0
    %v1223 = vmul.f32 %v1205, %v1221
    %1225 = vrot.lane.b32.xlu0 %v1223, 64
    %v1226 = vpop.permute.xlu0 %1225
    %v1228 = vadd.f32 %v1222, %v1226
    %v1229 = vtanh.pop %v1228
    %v1230 = vmul.f32 %v1220, %v1229
    %1232 = vrot.lane.b32.xlu0 %v1230, 64
    %v1233 = vpop.permute.xlu0 %1232
    %v1234 = vsel %vm227, %v1233, 0
    %1236 = vmatpush.msra.mxu0 0.0
    %1237 = vmatpush.msra.mxu0 0.0
    %1238 = vmatpush.msra.mxu0 0.0
    %1239 = vmatpush.msra.mxu0 0.0
    %1240 = vmatpush.msra.mxu0 0.0
    %1241 = vmatpush.msra.mxu0 0.0
    %1242 = vmatpush.msra.mxu0 0.0
    %1243 = vmatpush.msra.mxu0 0.0
    %1244 = vmatpush.msra.mxu0 %v100
    %1245 = vmatpush.msra.mxu0 %v98
    %1246 = vmatpush.msra.mxu0 %v96
    %1247 = vmatpush.msra.mxu0 %v94
    %1248 = vmatpush.msra.mxu0 %v92
    %1249 = vmatpush.msra.mxu0 %v90
    %1250 = vmatpush.msra.mxu0 %v88
    %1251 = vmatpush.msra.mxu0 %v86
    %1252 = vmatmul.f32.gmra.mxu0 %v1234
    %v1253 = vpop.f32.mrf.mxu0
    %v1254 = vadd.f32 0.0, %v1253
    %1255 = vdwg.mxu0
    %1256 = vmatpush.msra.mxu0 0.0
    %1257 = vmatpush.msra.mxu0 0.0
    %1258 = vmatpush.msra.mxu0 0.0
    %1259 = vmatpush.msra.mxu0 0.0
    %1260 = vmatpush.msra.mxu0 0.0
    %1261 = vmatpush.msra.mxu0 0.0
    %1262 = vmatpush.msra.mxu0 0.0
    %1263 = vmatpush.msra.mxu0 0.0
    %1264 = vmatpush.msra.mxu0 %v101
    %1265 = vmatpush.msra.mxu0 %v99
    %1266 = vmatpush.msra.mxu0 %v97
    %1267 = vmatpush.msra.mxu0 %v95
    %1268 = vmatpush.msra.mxu0 %v93
    %1269 = vmatpush.msra.mxu0 %v91
    %1270 = vmatpush.msra.mxu0 %v89
    %1271 = vmatpush.msra.mxu0 %v87
    %1272 = vmatmul.f32.gmra.mxu0 %v1234
    %v1273 = vpop.f32.mrf.mxu0
    %v1274 = vadd.f32 0.0, %v1273
    %1275 = vdwg.mxu0
    %v1276 = vadd.f32 %v1080, %v1254
    %v1277 = vadd.f32 %v1121, %v1274
    %v1278 = vxor.u32 %v1276, 2147483648
    %v1279 = vxor.u32 %v1277, 2147483648
    %v1280 = vmul.f32 %v1278, 1.442695
    %v1281 = vpow.pop %v1280
    %v1282 = vmul.f32 %v1279, 1.442695
    %v1283 = vpow.pop %v1282
    %v1284 = vadd.f32 %v1281, 1.0
    %v1285 = vadd.f32 %v1283, 1.0
    %v1286 = vrcp.pop %v1284
    %v1287 = vmul.f32 %v1284, %v1286
    %v1288 = vsub.f32 1.0, %v1287
    %v1289 = vmul.f32 %v1286, %v1288
    %v1290 = vadd.f32 %v1286, %v1289
    %vm1291 = vweird.f32 %v1284
    %vm1292 = vweird.f32 %v1286
    %vm1293 = vmor %vm1291, %vm1292
    %v1294 = vsel %vm1293, %v1286, %v1290
    %v1295 = vand.u32 2147483647, %v1284
    %vm1296 = vcmp.eq.f32.partialorder %v1295, 8.507059e+37
    %v1297 = vand.u32 %v1284, 2147483648
    %v1298 = vor.u32 1.1754944e-38, %v1297
    %v1299 = vsel %vm1296, %v1298, %v1294
    %v1300 = vmul.f32 1.0, %v1299
    %v1301 = vrcp.pop %v1285
    %v1302 = vmul.f32 %v1285, %v1301
    %v1303 = vsub.f32 1.0, %v1302
    %v1304 = vmul.f32 %v1301, %v1303
    %v1305 = vadd.f32 %v1301, %v1304
    %vm1306 = vweird.f32 %v1285
    %vm1307 = vweird.f32 %v1301
    %vm1308 = vmor %vm1306, %vm1307
    %v1309 = vsel %vm1308, %v1301, %v1305
    %v1310 = vand.u32 2147483647, %v1285
    %vm1311 = vcmp.eq.f32.partialorder %v1310, 8.507059e+37
    %v1312 = vand.u32 %v1285, 2147483648
    %v1313 = vor.u32 1.1754944e-38, %v1312
    %v1314 = vsel %vm1311, %v1313, %v1309
    %v1315 = vmul.f32 1.0, %v1314
    %v1316 = vtanh.pop %v1277
    %v1317 = vmul.f32 %v1300, %v1228
    %v1318 = vmul.f32 %v1300, %v1316
    %1320 = vrot.lane.b32.xlu0 %v1318, 64
    %v1321 = vpop.permute.xlu0 %1320
    %v1323 = vadd.f32 %v1317, %v1321
    %v1324 = vtanh.pop %v1323
    %v1325 = vmul.f32 %v1315, %v1324
    %1327 = vrot.lane.b32.xlu0 %v1325, 64
    %v1328 = vpop.permute.xlu0 %1327
    %v1329 = vsel %vm227, %v1328, 0
    %1331 = vmatpush.msra.mxu0 0.0
    %1332 = vmatpush.msra.mxu0 0.0
    %1333 = vmatpush.msra.mxu0 0.0
    %1334 = vmatpush.msra.mxu0 0.0
    %1335 = vmatpush.msra.mxu0 0.0
    %1336 = vmatpush.msra.mxu0 0.0
    %1337 = vmatpush.msra.mxu0 0.0
    %1338 = vmatpush.msra.mxu0 0.0
    %1339 = vmatpush.msra.mxu0 %v100
    %1340 = vmatpush.msra.mxu0 %v98
    %1341 = vmatpush.msra.mxu0 %v96
    %1342 = vmatpush.msra.mxu0 %v94
    %1343 = vmatpush.msra.mxu0 %v92
    %1344 = vmatpush.msra.mxu0 %v90
    %1345 = vmatpush.msra.mxu0 %v88
    %1346 = vmatpush.msra.mxu0 %v86
    %1347 = vmatmul.f32.gmra.mxu0 %v1329
    %v1348 = vpop.f32.mrf.mxu0
    %v1349 = vadd.f32 0.0, %v1348
    %1350 = vdwg.mxu0
    %1351 = vmatpush.msra.mxu0 0.0
    %1352 = vmatpush.msra.mxu0 0.0
    %1353 = vmatpush.msra.mxu0 0.0
    %1354 = vmatpush.msra.mxu0 0.0
    %1355 = vmatpush.msra.mxu0 0.0
    %1356 = vmatpush.msra.mxu0 0.0
    %1357 = vmatpush.msra.mxu0 0.0
    %1358 = vmatpush.msra.mxu0 0.0
    %1359 = vmatpush.msra.mxu0 %v101
    %1360 = vmatpush.msra.mxu0 %v99
    %1361 = vmatpush.msra.mxu0 %v97
    %1362 = vmatpush.msra.mxu0 %v95
    %1363 = vmatpush.msra.mxu0 %v93
    %1364 = vmatpush.msra.mxu0 %v91
    %1365 = vmatpush.msra.mxu0 %v89
    %1366 = vmatpush.msra.mxu0 %v87
    %1367 = vmatmul.f32.gmra.mxu0 %v1329
    %v1368 = vpop.f32.mrf.mxu0
    %v1369 = vadd.f32 0.0, %v1368
    %1370 = vdwg.mxu0
    %v1371 = vadd.f32 %v1083, %v1349
    %v1372 = vadd.f32 %v1124, %v1369
    %v1373 = vxor.u32 %v1371, 2147483648
    %v1374 = vxor.u32 %v1372, 2147483648
    %v1375 = vmul.f32 %v1373, 1.442695
    %v1376 = vpow.pop %v1375
    %v1377 = vmul.f32 %v1374, 1.442695
    %v1378 = vpow.pop %v1377
    %v1379 = vadd.f32 %v1376, 1.0
    %v1380 = vadd.f32 %v1378, 1.0
    %v1381 = vrcp.pop %v1379
    %v1382 = vmul.f32 %v1379, %v1381
    %v1383 = vsub.f32 1.0, %v1382
    %v1384 = vmul.f32 %v1381, %v1383
    %v1385 = vadd.f32 %v1381, %v1384
    %vm1386 = vweird.f32 %v1379
    %vm1387 = vweird.f32 %v1381
    %vm1388 = vmor %vm1386, %vm1387
    %v1389 = vsel %vm1388, %v1381, %v1385
    %v1390 = vand.u32 2147483647, %v1379
    %vm1391 = vcmp.eq.f32.partialorder %v1390, 8.507059e+37
    %v1392 = vand.u32 %v1379, 2147483648
    %v1393 = vor.u32 1.1754944e-38, %v1392
    %v1394 = vsel %vm1391, %v1393, %v1389
    %v1395 = vmul.f32 1.0, %v1394
    %v1396 = vrcp.pop %v1380
    %v1397 = vmul.f32 %v1380, %v1396
    %v1398 = vsub.f32 1.0, %v1397
    %v1399 = vmul.f32 %v1396, %v1398
    %v1400 = vadd.f32 %v1396, %v1399
    %vm1401 = vweird.f32 %v1380
    %vm1402 = vweird.f32 %v1396
    %vm1403 = vmor %vm1401, %vm1402
    %v1404 = vsel %vm1403, %v1396, %v1400
    %v1405 = vand.u32 2147483647, %v1380
    %vm1406 = vcmp.eq.f32.partialorder %v1405, 8.507059e+37
    %v1407 = vand.u32 %v1380, 2147483648
    %v1408 = vor.u32 1.1754944e-38, %v1407
    %v1409 = vsel %vm1406, %v1408, %v1404
    %v1410 = vmul.f32 1.0, %v1409
    %v1411 = vtanh.pop %v1372
    %v1412 = vmul.f32 %v1395, %v1323
    %v1413 = vmul.f32 %v1395, %v1411
    %1415 = vrot.lane.b32.xlu0 %v1413, 64
    %v1416 = vpop.permute.xlu0 %1415
    %v1418 = vadd.f32 %v1412, %v1416
    %v1419 = vtanh.pop %v1418
    %v1420 = vmul.f32 %v1410, %v1419
    %1422 = vrot.lane.b32.xlu0 %v1420, 64
    %v1423 = vpop.permute.xlu0 %1422
    %v1424 = vsel %vm227, %v1423, 0
    %1426 = vmatpush.msra.mxu0 0.0
    %1427 = vmatpush.msra.mxu0 0.0
    %1428 = vmatpush.msra.mxu0 0.0
    %1429 = vmatpush.msra.mxu0 0.0
    %1430 = vmatpush.msra.mxu0 0.0
    %1431 = vmatpush.msra.mxu0 0.0
    %1432 = vmatpush.msra.mxu0 0.0
    %1433 = vmatpush.msra.mxu0 0.0
    %1434 = vmatpush.msra.mxu0 %v100
    %1435 = vmatpush.msra.mxu0 %v98
    %1436 = vmatpush.msra.mxu0 %v96
    %1437 = vmatpush.msra.mxu0 %v94
    %1438 = vmatpush.msra.mxu0 %v92
    %1439 = vmatpush.msra.mxu0 %v90
    %1440 = vmatpush.msra.mxu0 %v88
    %1441 = vmatpush.msra.mxu0 %v86
    %1442 = vmatmul.f32.gmra.mxu0 %v1424
    %v1443 = vpop.f32.mrf.mxu0
    %v1444 = vadd.f32 0.0, %v1443
    %1445 = vdwg.mxu0
    %1446 = vmatpush.msra.mxu0 0.0
    %1447 = vmatpush.msra.mxu0 0.0
    %1448 = vmatpush.msra.mxu0 0.0
    %1449 = vmatpush.msra.mxu0 0.0
    %1450 = vmatpush.msra.mxu0 0.0
    %1451 = vmatpush.msra.mxu0 0.0
    %1452 = vmatpush.msra.mxu0 0.0
    %1453 = vmatpush.msra.mxu0 0.0
    %1454 = vmatpush.msra.mxu0 %v101
    %1455 = vmatpush.msra.mxu0 %v99
    %1456 = vmatpush.msra.mxu0 %v97
    %1457 = vmatpush.msra.mxu0 %v95
    %1458 = vmatpush.msra.mxu0 %v93
    %1459 = vmatpush.msra.mxu0 %v91
    %1460 = vmatpush.msra.mxu0 %v89
    %1461 = vmatpush.msra.mxu0 %v87
    %1462 = vmatmul.f32.gmra.mxu0 %v1424
    %v1463 = vpop.f32.mrf.mxu0
    %v1464 = vadd.f32 0.0, %v1463
    %1465 = vdwg.mxu0
    %v1466 = vadd.f32 %v1086, %v1444
    %v1467 = vadd.f32 %v1127, %v1464
    %v1468 = vxor.u32 %v1466, 2147483648
    %v1469 = vxor.u32 %v1467, 2147483648
    %v1470 = vmul.f32 %v1468, 1.442695
    %v1471 = vpow.pop %v1470
    %v1472 = vmul.f32 %v1469, 1.442695
    %v1473 = vpow.pop %v1472
    %v1474 = vadd.f32 %v1471, 1.0
    %v1475 = vadd.f32 %v1473, 1.0
    %v1476 = vrcp.pop %v1474
    %v1477 = vmul.f32 %v1474, %v1476
    %v1478 = vsub.f32 1.0, %v1477
    %v1479 = vmul.f32 %v1476, %v1478
    %v1480 = vadd.f32 %v1476, %v1479
    %vm1481 = vweird.f32 %v1474
    %vm1482 = vweird.f32 %v1476
    %vm1483 = vmor %vm1481, %vm1482
    %v1484 = vsel %vm1483, %v1476, %v1480
    %v1485 = vand.u32 2147483647, %v1474
    %vm1486 = vcmp.eq.f32.partialorder %v1485, 8.507059e+37
    %v1487 = vand.u32 %v1474, 2147483648
    %v1488 = vor.u32 1.1754944e-38, %v1487
    %v1489 = vsel %vm1486, %v1488, %v1484
    %v1490 = vmul.f32 1.0, %v1489
    %v1491 = vrcp.pop %v1475
    %v1492 = vmul.f32 %v1475, %v1491
    %v1493 = vsub.f32 1.0, %v1492
    %v1494 = vmul.f32 %v1491, %v1493
    %v1495 = vadd.f32 %v1491, %v1494
    %vm1496 = vweird.f32 %v1475
    %vm1497 = vweird.f32 %v1491
    %vm1498 = vmor %vm1496, %vm1497
    %v1499 = vsel %vm1498, %v1491, %v1495
    %v1500 = vand.u32 2147483647, %v1475
    %vm1501 = vcmp.eq.f32.partialorder %v1500, 8.507059e+37
    %v1502 = vand.u32 %v1475, 2147483648
    %v1503 = vor.u32 1.1754944e-38, %v1502
    %v1504 = vsel %vm1501, %v1503, %v1499
    %v1505 = vmul.f32 1.0, %v1504
    %v1506 = vtanh.pop %v1467
    %v1507 = vmul.f32 %v1490, %v1418
    %v1508 = vmul.f32 %v1490, %v1506
    %1510 = vrot.lane.b32.xlu0 %v1508, 64
    %v1511 = vpop.permute.xlu0 %1510
    %v1513 = vadd.f32 %v1507, %v1511
    %v1514 = vtanh.pop %v1513
    %v1515 = vmul.f32 %v1505, %v1514
    %1517 = vrot.lane.b32.xlu0 %v1515, 64
    %v1518 = vpop.permute.xlu0 %1517
    %v1519 = vsel %vm227, %v1518, 0
    %1521 = vmatpush.msra.mxu0 0.0
    %1522 = vmatpush.msra.mxu0 0.0
    %1523 = vmatpush.msra.mxu0 0.0
    %1524 = vmatpush.msra.mxu0 0.0
    %1525 = vmatpush.msra.mxu0 0.0
    %1526 = vmatpush.msra.mxu0 0.0
    %1527 = vmatpush.msra.mxu0 0.0
    %1528 = vmatpush.msra.mxu0 0.0
    %1529 = vmatpush.msra.mxu0 %v100
    %1530 = vmatpush.msra.mxu0 %v98
    %1531 = vmatpush.msra.mxu0 %v96
    %1532 = vmatpush.msra.mxu0 %v94
    %1533 = vmatpush.msra.mxu0 %v92
    %1534 = vmatpush.msra.mxu0 %v90
    %1535 = vmatpush.msra.mxu0 %v88
    %1536 = vmatpush.msra.mxu0 %v86
    %1537 = vmatmul.f32.gmra.mxu0 %v1519
    %v1538 = vpop.f32.mrf.mxu0
    %v1539 = vadd.f32 0.0, %v1538
    %1540 = vdwg.mxu0
    %1541 = vmatpush.msra.mxu0 0.0
    %1542 = vmatpush.msra.mxu0 0.0
    %1543 = vmatpush.msra.mxu0 0.0
    %1544 = vmatpush.msra.mxu0 0.0
    %1545 = vmatpush.msra.mxu0 0.0
    %1546 = vmatpush.msra.mxu0 0.0
    %1547 = vmatpush.msra.mxu0 0.0
    %1548 = vmatpush.msra.mxu0 0.0
    %1549 = vmatpush.msra.mxu0 %v101
    %1550 = vmatpush.msra.mxu0 %v99
    %1551 = vmatpush.msra.mxu0 %v97
    %1552 = vmatpush.msra.mxu0 %v95
    %1553 = vmatpush.msra.mxu0 %v93
    %1554 = vmatpush.msra.mxu0 %v91
    %1555 = vmatpush.msra.mxu0 %v89
    %1556 = vmatpush.msra.mxu0 %v87
    %1557 = vmatmul.f32.gmra.mxu0 %v1519
    %v1558 = vpop.f32.mrf.mxu0
    %v1559 = vadd.f32 0.0, %v1558
    %1560 = vdwg.mxu0
    %v1561 = vadd.f32 %v1089, %v1539
    %v1562 = vadd.f32 %v1130, %v1559
    %v1563 = vxor.u32 %v1561, 2147483648
    %v1564 = vxor.u32 %v1562, 2147483648
    %v1565 = vmul.f32 %v1563, 1.442695
    %v1566 = vpow.pop %v1565
    %v1567 = vmul.f32 %v1564, 1.442695
    %v1568 = vpow.pop %v1567
    %v1569 = vadd.f32 %v1566, 1.0
    %v1570 = vadd.f32 %v1568, 1.0
    %v1571 = vrcp.pop %v1569
    %v1572 = vmul.f32 %v1569, %v1571
    %v1573 = vsub.f32 1.0, %v1572
    %v1574 = vmul.f32 %v1571, %v1573
    %v1575 = vadd.f32 %v1571, %v1574
    %vm1576 = vweird.f32 %v1569
    %vm1577 = vweird.f32 %v1571
    %vm1578 = vmor %vm1576, %vm1577
    %v1579 = vsel %vm1578, %v1571, %v1575
    %v1580 = vand.u32 2147483647, %v1569
    %vm1581 = vcmp.eq.f32.partialorder %v1580, 8.507059e+37
    %v1582 = vand.u32 %v1569, 2147483648
    %v1583 = vor.u32 1.1754944e-38, %v1582
    %v1584 = vsel %vm1581, %v1583, %v1579
    %v1585 = vmul.f32 1.0, %v1584
    %v1586 = vrcp.pop %v1570
    %v1587 = vmul.f32 %v1570, %v1586
    %v1588 = vsub.f32 1.0, %v1587
    %v1589 = vmul.f32 %v1586, %v1588
    %v1590 = vadd.f32 %v1586, %v1589
    %vm1591 = vweird.f32 %v1570
    %vm1592 = vweird.f32 %v1586
    %vm1593 = vmor %vm1591, %vm1592
    %v1594 = vsel %vm1593, %v1586, %v1590
    %v1595 = vand.u32 2147483647, %v1570
    %vm1596 = vcmp.eq.f32.partialorder %v1595, 8.507059e+37
    %v1597 = vand.u32 %v1570, 2147483648
    %v1598 = vor.u32 1.1754944e-38, %v1597
    %v1599 = vsel %vm1596, %v1598, %v1594
    %v1600 = vmul.f32 1.0, %v1599
    %v1601 = vtanh.pop %v1562
    %v1602 = vmul.f32 %v1585, %v1513
    %v1603 = vmul.f32 %v1585, %v1601
    %1605 = vrot.lane.b32.xlu0 %v1603, 64
    %v1606 = vpop.permute.xlu0 %1605
    %v1608 = vadd.f32 %v1602, %v1606
    %v1609 = vtanh.pop %v1608
    %v1610 = vmul.f32 %v1600, %v1609
    %1612 = vrot.lane.b32.xlu0 %v1610, 64
    %v1613 = vpop.permute.xlu0 %1612
    %v1614 = vsel %vm227, %v1613, 0
    %1616 = vmatpush.msra.mxu0 0.0
    %1617 = vmatpush.msra.mxu0 0.0
    %1618 = vmatpush.msra.mxu0 0.0
    %1619 = vmatpush.msra.mxu0 0.0
    %1620 = vmatpush.msra.mxu0 0.0
    %1621 = vmatpush.msra.mxu0 0.0
    %1622 = vmatpush.msra.mxu0 0.0
    %1623 = vmatpush.msra.mxu0 0.0
    %1624 = vmatpush.msra.mxu0 %v100
    %1625 = vmatpush.msra.mxu0 %v98
    %1626 = vmatpush.msra.mxu0 %v96
    %1627 = vmatpush.msra.mxu0 %v94
    %1628 = vmatpush.msra.mxu0 %v92
    %1629 = vmatpush.msra.mxu0 %v90
    %1630 = vmatpush.msra.mxu0 %v88
    %1631 = vmatpush.msra.mxu0 %v86
    %1632 = vmatmul.f32.gmra.mxu0 %v1614
    %v1633 = vpop.f32.mrf.mxu0
    %v1634 = vadd.f32 0.0, %v1633
    %1635 = vdwg.mxu0
    %1636 = vmatpush.msra.mxu0 0.0
    %1637 = vmatpush.msra.mxu0 0.0
    %1638 = vmatpush.msra.mxu0 0.0
    %1639 = vmatpush.msra.mxu0 0.0
    %1640 = vmatpush.msra.mxu0 0.0
    %1641 = vmatpush.msra.mxu0 0.0
    %1642 = vmatpush.msra.mxu0 0.0
    %1643 = vmatpush.msra.mxu0 0.0
    %1644 = vmatpush.msra.mxu0 %v101
    %1645 = vmatpush.msra.mxu0 %v99
    %1646 = vmatpush.msra.mxu0 %v97
    %1647 = vmatpush.msra.mxu0 %v95
    %1648 = vmatpush.msra.mxu0 %v93
    %1649 = vmatpush.msra.mxu0 %v91
    %1650 = vmatpush.msra.mxu0 %v89
    %1651 = vmatpush.msra.mxu0 %v87
    %1652 = vmatmul.f32.gmra.mxu0 %v1614
    %v1653 = vpop.f32.mrf.mxu0
    %v1654 = vadd.f32 0.0, %v1653
    %1655 = vdwg.mxu0
    %v1656 = vadd.f32 %v1092, %v1634
    %v1657 = vadd.f32 %v1133, %v1654
    %v1658 = vxor.u32 %v1656, 2147483648
    %v1659 = vxor.u32 %v1657, 2147483648
    %v1660 = vmul.f32 %v1658, 1.442695
    %v1661 = vpow.pop %v1660
    %v1662 = vmul.f32 %v1659, 1.442695
    %v1663 = vpow.pop %v1662
    %v1664 = vadd.f32 %v1661, 1.0
    %v1665 = vadd.f32 %v1663, 1.0
    %v1666 = vrcp.pop %v1664
    %v1667 = vmul.f32 %v1664, %v1666
    %v1668 = vsub.f32 1.0, %v1667
    %v1669 = vmul.f32 %v1666, %v1668
    %v1670 = vadd.f32 %v1666, %v1669
    %vm1671 = vweird.f32 %v1664
    %vm1672 = vweird.f32 %v1666
    %vm1673 = vmor %vm1671, %vm1672
    %v1674 = vsel %vm1673, %v1666, %v1670
    %v1675 = vand.u32 2147483647, %v1664
    %vm1676 = vcmp.eq.f32.partialorder %v1675, 8.507059e+37
    %v1677 = vand.u32 %v1664, 2147483648
    %v1678 = vor.u32 1.1754944e-38, %v1677
    %v1679 = vsel %vm1676, %v1678, %v1674
    %v1680 = vmul.f32 1.0, %v1679
    %v1681 = vrcp.pop %v1665
    %v1682 = vmul.f32 %v1665, %v1681
    %v1683 = vsub.f32 1.0, %v1682
    %v1684 = vmul.f32 %v1681, %v1683
    %v1685 = vadd.f32 %v1681, %v1684
    %vm1686 = vweird.f32 %v1665
    %vm1687 = vweird.f32 %v1681
    %vm1688 = vmor %vm1686, %vm1687
    %v1689 = vsel %vm1688, %v1681, %v1685
    %v1690 = vand.u32 2147483647, %v1665
    %vm1691 = vcmp.eq.f32.partialorder %v1690, 8.507059e+37
    %v1692 = vand.u32 %v1665, 2147483648
    %v1693 = vor.u32 1.1754944e-38, %v1692
    %v1694 = vsel %vm1691, %v1693, %v1689
    %v1695 = vmul.f32 1.0, %v1694
    %v1696 = vtanh.pop %v1657
    %v1697 = vmul.f32 %v1680, %v1608
    %v1698 = vmul.f32 %v1680, %v1696
    %1700 = vrot.lane.b32.xlu0 %v1698, 64
    %v1701 = vpop.permute.xlu0 %1700
    %v1703 = vadd.f32 %v1697, %v1701
    %v1704 = vtanh.pop %v1703
    %v1705 = vmul.f32 %v1695, %v1704
    %1707 = vrot.lane.b32.xlu0 %v1705, 64
    %v1708 = vpop.permute.xlu0 %1707
    %v1709 = vsel %vm227, %v1708, 0
    %1711 = vmatpush.msra.mxu0 0.0
    %1712 = vmatpush.msra.mxu0 0.0
    %1713 = vmatpush.msra.mxu0 0.0
    %1714 = vmatpush.msra.mxu0 0.0
    %1715 = vmatpush.msra.mxu0 0.0
    %1716 = vmatpush.msra.mxu0 0.0
    %1717 = vmatpush.msra.mxu0 0.0
    %1718 = vmatpush.msra.mxu0 0.0
    %1719 = vmatpush.msra.mxu0 %v100
    %1720 = vmatpush.msra.mxu0 %v98
    %1721 = vmatpush.msra.mxu0 %v96
    %1722 = vmatpush.msra.mxu0 %v94
    %1723 = vmatpush.msra.mxu0 %v92
    %1724 = vmatpush.msra.mxu0 %v90
    %1725 = vmatpush.msra.mxu0 %v88
    %1726 = vmatpush.msra.mxu0 %v86
    %1727 = vmatmul.f32.gmra.mxu0 %v1709
    %v1728 = vpop.f32.mrf.mxu0
    %v1729 = vadd.f32 0.0, %v1728
    %1730 = vdwg.mxu0
    %1731 = vmatpush.msra.mxu0 0.0
    %1732 = vmatpush.msra.mxu0 0.0
    %1733 = vmatpush.msra.mxu0 0.0
    %1734 = vmatpush.msra.mxu0 0.0
    %1735 = vmatpush.msra.mxu0 0.0
    %1736 = vmatpush.msra.mxu0 0.0
    %1737 = vmatpush.msra.mxu0 0.0
    %1738 = vmatpush.msra.mxu0 0.0
    %1739 = vmatpush.msra.mxu0 %v101
    %1740 = vmatpush.msra.mxu0 %v99
    %1741 = vmatpush.msra.mxu0 %v97
    %1742 = vmatpush.msra.mxu0 %v95
    %1743 = vmatpush.msra.mxu0 %v93
    %1744 = vmatpush.msra.mxu0 %v91
    %1745 = vmatpush.msra.mxu0 %v89
    %1746 = vmatpush.msra.mxu0 %v87
    %1747 = vmatmul.f32.gmra.mxu0 %v1709
    %v1748 = vpop.f32.mrf.mxu0
    %v1749 = vadd.f32 0.0, %v1748
    %1750 = vdwg.mxu0
    %v1751 = vadd.f32 %v1095, %v1729
    %v1752 = vadd.f32 %v1136, %v1749
    %v1753 = vxor.u32 %v1751, 2147483648
    %v1754 = vxor.u32 %v1752, 2147483648
    %v1755 = vmul.f32 %v1753, 1.442695
    %v1756 = vpow.pop %v1755
    %v1757 = vmul.f32 %v1754, 1.442695
    %v1758 = vpow.pop %v1757
    %v1759 = vadd.f32 %v1756, 1.0
    %v1760 = vadd.f32 %v1758, 1.0
    %v1761 = vrcp.pop %v1759
    %v1762 = vmul.f32 %v1759, %v1761
    %v1763 = vsub.f32 1.0, %v1762
    %v1764 = vmul.f32 %v1761, %v1763
    %v1765 = vadd.f32 %v1761, %v1764
    %vm1766 = vweird.f32 %v1759
    %vm1767 = vweird.f32 %v1761
    %vm1768 = vmor %vm1766, %vm1767
    %v1769 = vsel %vm1768, %v1761, %v1765
    %v1770 = vand.u32 2147483647, %v1759
    %vm1771 = vcmp.eq.f32.partialorder %v1770, 8.507059e+37
    %v1772 = vand.u32 %v1759, 2147483648
    %v1773 = vor.u32 1.1754944e-38, %v1772
    %v1774 = vsel %vm1771, %v1773, %v1769
    %v1775 = vmul.f32 1.0, %v1774
    %v1776 = vrcp.pop %v1760
    %v1777 = vmul.f32 %v1760, %v1776
    %v1778 = vsub.f32 1.0, %v1777
    %v1779 = vmul.f32 %v1776, %v1778
    %v1780 = vadd.f32 %v1776, %v1779
    %vm1781 = vweird.f32 %v1760
    %vm1782 = vweird.f32 %v1776
    %vm1783 = vmor %vm1781, %vm1782
    %v1784 = vsel %vm1783, %v1776, %v1780
    %v1785 = vand.u32 2147483647, %v1760
    %vm1786 = vcmp.eq.f32.partialorder %v1785, 8.507059e+37
    %v1787 = vand.u32 %v1760, 2147483648
    %v1788 = vor.u32 1.1754944e-38, %v1787
    %v1789 = vsel %vm1786, %v1788, %v1784
    %v1790 = vmul.f32 1.0, %v1789
    %v1791 = vtanh.pop %v1752
    %v1792 = vmul.f32 %v1775, %v1703
    %v1793 = vmul.f32 %v1775, %v1791
    %1795 = vrot.lane.b32.xlu0 %v1793, 64
    %v1796 = vpop.permute.xlu0 %1795
    %v1798 = vadd.f32 %v1792, %v1796
    %v1799 = vtanh.pop %v1798
    %v1800 = vmul.f32 %v1790, %v1799
    %1802 = vrot.lane.b32.xlu0 %v1800, 64
    %v1803 = vpop.permute.xlu0 %1802
    %v1804 = vsel %vm227, %v1803, 0
    %1806 = vmatpush.msra.mxu0 0.0
    %1807 = vmatpush.msra.mxu0 0.0
    %1808 = vmatpush.msra.mxu0 0.0
    %1809 = vmatpush.msra.mxu0 0.0
    %1810 = vmatpush.msra.mxu0 0.0
    %1811 = vmatpush.msra.mxu0 0.0
    %1812 = vmatpush.msra.mxu0 0.0
    %1813 = vmatpush.msra.mxu0 0.0
    %1814 = vmatpush.msra.mxu0 %v100
    %1815 = vmatpush.msra.mxu0 %v98
    %1816 = vmatpush.msra.mxu0 %v96
    %1817 = vmatpush.msra.mxu0 %v94
    %1818 = vmatpush.msra.mxu0 %v92
    %1819 = vmatpush.msra.mxu0 %v90
    %1820 = vmatpush.msra.mxu0 %v88
    %1821 = vmatpush.msra.mxu0 %v86
    %1822 = vmatmul.f32.gmra.mxu0 %v1804
    %v1823 = vpop.f32.mrf.mxu0
    %v1824 = vadd.f32 0.0, %v1823
    %1825 = vdwg.mxu0
    %1826 = vmatpush.msra.mxu0 0.0
    %1827 = vmatpush.msra.mxu0 0.0
    %1828 = vmatpush.msra.mxu0 0.0
    %1829 = vmatpush.msra.mxu0 0.0
    %1830 = vmatpush.msra.mxu0 0.0
    %1831 = vmatpush.msra.mxu0 0.0
    %1832 = vmatpush.msra.mxu0 0.0
    %1833 = vmatpush.msra.mxu0 0.0
    %1834 = vmatpush.msra.mxu0 %v101
    %1835 = vmatpush.msra.mxu0 %v99
    %1836 = vmatpush.msra.mxu0 %v97
    %1837 = vmatpush.msra.mxu0 %v95
    %1838 = vmatpush.msra.mxu0 %v93
    %1839 = vmatpush.msra.mxu0 %v91
    %1840 = vmatpush.msra.mxu0 %v89
    %1841 = vmatpush.msra.mxu0 %v87
    %1842 = vmatmul.f32.gmra.mxu0 %v1804
    %v1843 = vpop.f32.mrf.mxu0
    %v1844 = vadd.f32 0.0, %v1843
    %1845 = vdwg.mxu0
    %v1846 = vadd.f32 %v1098, %v1824
    %v1847 = vadd.f32 %v1139, %v1844
    %v1848 = vxor.u32 %v1846, 2147483648
    %v1849 = vxor.u32 %v1847, 2147483648
    %v1850 = vmul.f32 %v1848, 1.442695
    %v1851 = vpow.pop %v1850
    %v1852 = vmul.f32 %v1849, 1.442695
    %v1853 = vpow.pop %v1852
    %v1854 = vadd.f32 %v1851, 1.0
    %v1855 = vadd.f32 %v1853, 1.0
    %v1856 = vrcp.pop %v1854
    %v1857 = vmul.f32 %v1854, %v1856
    %v1858 = vsub.f32 1.0, %v1857
    %v1859 = vmul.f32 %v1856, %v1858
    %v1860 = vadd.f32 %v1856, %v1859
    %vm1861 = vweird.f32 %v1854
    %vm1862 = vweird.f32 %v1856
    %vm1863 = vmor %vm1861, %vm1862
    %v1864 = vsel %vm1863, %v1856, %v1860
    %v1865 = vand.u32 2147483647, %v1854
    %vm1866 = vcmp.eq.f32.partialorder %v1865, 8.507059e+37
    %v1867 = vand.u32 %v1854, 2147483648
    %v1868 = vor.u32 1.1754944e-38, %v1867
    %v1869 = vsel %vm1866, %v1868, %v1864
    %v1870 = vmul.f32 1.0, %v1869
    %v1871 = vrcp.pop %v1855
    %v1872 = vmul.f32 %v1855, %v1871
    %v1873 = vsub.f32 1.0, %v1872
    %v1874 = vmul.f32 %v1871, %v1873
    %v1875 = vadd.f32 %v1871, %v1874
    %vm1876 = vweird.f32 %v1855
    %vm1877 = vweird.f32 %v1871
    %vm1878 = vmor %vm1876, %vm1877
    %v1879 = vsel %vm1878, %v1871, %v1875
    %v1880 = vand.u32 2147483647, %v1855
    %vm1881 = vcmp.eq.f32.partialorder %v1880, 8.507059e+37
    %v1882 = vand.u32 %v1855, 2147483648
    %v1883 = vor.u32 1.1754944e-38, %v1882
    %v1884 = vsel %vm1881, %v1883, %v1879
    %v1885 = vmul.f32 1.0, %v1884
    %v1886 = vtanh.pop %v1847
    %v1887 = vmul.f32 %v1870, %v1798
    %v1888 = vmul.f32 %v1870, %v1886
    %1890 = vrot.lane.b32.xlu0 %v1888, 64
    %v1891 = vpop.permute.xlu0 %1890
    %v1893 = vadd.f32 %v1887, %v1891
    %v1894 = vtanh.pop %v1893
    %v1895 = vmul.f32 %v1885, %v1894
    %v1896 = vld [vmem:[%s7] sm:$0xff]
    %v1897 = vld [vmem:[%s7 + $0x8] sm:$0xff]
    %v1898 = vld [vmem:[%s7 + $0x10] sm:$0xff]
    %v1899 = vld [vmem:[%s7 + $0x18] sm:$0xff]
    %v1900 = vld [vmem:[%s7 + $0x20] sm:$0xff]
    %v1901 = vld [vmem:[%s7 + $0x28] sm:$0xff]
    %v1902 = vld [vmem:[%s7 + $0x30] sm:$0xff]
    %v1903 = vld [vmem:[%s7 + $0x38] sm:$0xff]
    %v1904 = vld [vmem:[%s8] sm:$0x1]
    %v1906 = vperm.slane %v1904, 0
    %1909 = vrot.lane.b32.xlu0 %v1895, 64
    %v1910 = vpop.permute.xlu0 %1909
    %v1911 = vsel %vm227, %v1910, 0
    %1913 = vmatpush.msra.mxu0 0.0
    %1914 = vmatpush.msra.mxu0 0.0
    %1915 = vmatpush.msra.mxu0 0.0
    %1916 = vmatpush.msra.mxu0 0.0
    %1917 = vmatpush.msra.mxu0 0.0
    %1918 = vmatpush.msra.mxu0 0.0
    %1919 = vmatpush.msra.mxu0 0.0
    %1920 = vmatpush.msra.mxu0 0.0
    %1921 = vmatpush.msra.mxu0 %v1903
    %1922 = vmatpush.msra.mxu0 %v1902
    %1923 = vmatpush.msra.mxu0 %v1901
    %1924 = vmatpush.msra.mxu0 %v1900
    %1925 = vmatpush.msra.mxu0 %v1899
    %1926 = vmatpush.msra.mxu0 %v1898
    %1927 = vmatpush.msra.mxu0 %v1897
    %1928 = vmatpush.msra.mxu0 %v1896
    %1929 = vmatmul.f32.gmra.mxu0 %v1911
    %v1930 = vpop.f32.mrf.mxu0
    %v1931 = vadd.f32 %v1906, %v1930
    %1932 = vdwg.mxu0
    %v1933 = vmax.f32 %v1931, 0.0
    %v1934 = vld [vmem:[%s9] sm:$0xff]
    %v1935 = vld [vmem:[%s9 + $0x8] sm:$0xff]
    %v1936 = vld [vmem:[%s9 + $0x10] sm:$0xff]
    %v1937 = vld [vmem:[%s9 + $0x18] sm:$0xff]
    %v1938 = vld [vmem:[%s10] sm:$0x1]
    %v1940 = vperm.slane %v1938, 0
    %vm1942 = vcmask 261120
    %v1944 = vsel %vm1942, %v1933, 0
    %1946 = vmatpush.msra.mxu0 0.0
    %1947 = vmatpush.msra.mxu0 0.0
    %1948 = vmatpush.msra.mxu0 0.0
    %1949 = vmatpush.msra.mxu0 0.0
    %1950 = vmatpush.msra.mxu0 0.0
    %1951 = vmatpush.msra.mxu0 0.0
    %1952 = vmatpush.msra.mxu0 0.0
    %1953 = vmatpush.msra.mxu0 0.0
    %1954 = vmatpush.msra.mxu0 0.0
    %1955 = vmatpush.msra.mxu0 0.0
    %1956 = vmatpush.msra.mxu0 0.0
    %1957 = vmatpush.msra.mxu0 0.0
    %1958 = vmatpush.msra.mxu0 %v1937
    %1959 = vmatpush.msra.mxu0 %v1936
    %1960 = vmatpush.msra.mxu0 %v1935
    %1961 = vmatpush.msra.mxu0 %v1934
    %1962 = vmatmul.f32.gmra.mxu0 %v1944
    %v1963 = vpop.f32.mrf.mxu0
    %v1964 = vadd.f32 %v1940, %v1963
    %1965 = vdwg.mxu0
    %vm1966 = vcmask 31744
    %1967 = vst.msk [vmem:[%s11] sm:$0xff] %vm1966, %v1964
    // Predicated region
    $region54: #{tpu_custom_call.1} parent=1 // pred_check
      _
    $region55: #{tpu_custom_call.1} parent=1 // pred_check_branch
      %1969 = sbr.rel (0) target = $region57
    $region56: #{tpu_custom_call.1} parent=1 // pred_region
      _
    $region57: #{tpu_custom_call.1} parent=1 // pred_fallthru
      _
    // Predicated region
    $region58: #{tpu_custom_call.1} parent=1 // pred_check
      _
    $region59: #{tpu_custom_call.1} parent=1 // pred_check_branch
      %1971 = sbr.rel (0) target = $region61
    $region60: #{tpu_custom_call.1} parent=1 // pred_region
      _
    $region61: #{tpu_custom_call.1} parent=1 // pred_fallthru
      _
    %1972 = vsyncpa [#allocation4], 1
    %1973 = vsyncpa [#allocation6], 1

</llo_original>
